<compile_context>
chip_gen: v7x
topology: tpu7x:2x2x1
jax: 0.10.0
libtpu: 0.0.40
codegen_flags: <defaults>
</compile_context>

<pallas_src>
import functools
import math

import jax
import jax.numpy as jnp
import numpy as np
from jax.experimental import pallas as pl
from jax.experimental.pallas import tpu as pltpu


def _layernorm(v, gamma, beta, eps=1e-5):
    mu = jnp.mean(v, axis=-1, keepdims=True)
    var = jnp.mean((v - mu) ** 2, axis=-1, keepdims=True)
    return (v - mu) * jax.lax.rsqrt(var + eps) * gamma + beta


def _bdot(a, b, ca, cb):
    """Head-batched matmul (batch dim 0 on both operands), f32 accumulation."""
    return jax.lax.dot_general(
        a, b,
        dimension_numbers=(((ca,), (cb,)), ((0,), (0,))),
        preferred_element_type=jnp.float32)


def cross_attention_kernel(
    x_ref, y_ref,
    ln1_g_ref, ln1_b_ref,
    wq_ref, bq_ref,          # (D, D)  bf16, (1, D)  f32
    wkv_ref, bkv_ref,        # (D, 2D) bf16, (1, 2D) f32   fused K/V projection
    wo_ref, bo_ref,          # (D, D)  bf16, (1, D)  f32
    ln2_g_ref, ln2_b_ref,
    w1_ref, b1_ref,          # (D, 4D), (1, 4D)
    w2_ref, b2_ref,          # (4D, D), (1, D)
    o_ref,
    k_scratch, v_scratch,    # (H, Lk, hd) bf16 each — persistent per-batch K/V
    *, nhead: int,
):
    D = o_ref.shape[-1]
    hd = D // nhead
    scale = 1.0 / math.sqrt(hd)
    cdt = wq_ref.dtype        # MXU operand dtype (bf16); accumulation stays f32.

    g1 = ln1_g_ref[0]
    be1 = ln1_b_ref[0]

    # ---- Hoisted per-batch work: norm_1(y) + fused dense K/V projection ----------
    # Runs only on the first query tile of each batch element; results persist in
    # bf16 VMEM scratch across the (arbitrary) qi axis.
    @pl.when(pl.program_id(1) == 0)
    def _():
        y = y_ref[0].astype(jnp.float32)                                  # (Lk, D)
        yn = _layernorm(y, g1, be1)
        kv = jnp.dot(yn.astype(cdt), wkv_ref[...],
                     preferred_element_type=jnp.float32) + bkv_ref[0]     # (Lk, 2D)
        for h in range(nhead):                      # static; once per batch element
            k_scratch[h] = kv[:, h * hd:(h + 1) * hd].astype(cdt)
            v_scratch[h] = kv[:, D + h * hd:D + (h + 1) * hd].astype(cdt)

    # ---- Per-query-tile work -------------------------------------------------------
    x = x_ref[0].astype(jnp.float32)                                      # (TQ, D)
    xn = _layernorm(x, g1, be1)                                           # norm_1(x)

    # Dense full-width Q projection (single MXU matmul), 1/sqrt(hd) folded into Q.
    q = jnp.dot(xn.astype(cdt), wq_ref[...],
                preferred_element_type=jnp.float32) + bq_ref[0]           # (TQ, D) f32
    qc = (q * scale).astype(cdt)
    # Head split: static lane slices + major-axis stack -> (H, TQ, hd) bf16.
    qh = jnp.stack([qc[:, h * hd:(h + 1) * hd] for h in range(nhead)], axis=0)

    kh = k_scratch[...]                                                   # (H, Lk, hd) bf16
    vh = v_scratch[...]

    # Attention core: head-batched dots, bf16 operands, f32 accumulation.
    s = _bdot(qh, kh, 2, 2)                                               # (H, TQ, Lk) f32
    s = s - jnp.max(s, axis=-1, keepdims=True)
    p = jnp.exp(s)
    p = p * pl.reciprocal(jnp.sum(p, axis=-1, keepdims=True), approx=True)
    ctx = _bdot(p.astype(cdt), vh, 2, 1)                                  # (H, TQ, hd) f32

    # Merge heads -> (TQ, D) and run ONE dense (D, D) output projection.
    ctx2 = jnp.concatenate([ctx[h] for h in range(nhead)], axis=-1).astype(cdt)
    attn = jnp.dot(ctx2, wo_ref[...],
                   preferred_element_type=jnp.float32) + bo_ref[0]        # (TQ, D)

    # Residual + norm_2 (the module adds the *normalized* x, matching its forward).
    xr = xn + attn
    xn2 = _layernorm(xr, ln2_g_ref[0], ln2_b_ref[0])

    # FFN; dropout(p=0.5) is identity in eval mode.
    h1 = jnp.dot(xn2.astype(cdt), w1_ref[...],
                 preferred_element_type=jnp.float32) + b1_ref[0]
    h1 = jnp.maximum(h1, 0.0)
    ff = jnp.dot(h1.astype(cdt), w2_ref[...],
                 preferred_element_type=jnp.float32) + b2_ref[0]

    o_ref[0] = (xn2 + ff).astype(o_ref.dtype)


_WEIGHT_ORDER = ("ln1_g", "ln1_b", "wq", "bq", "wkv", "bkv",
                 "wo", "bo", "ln2_g", "ln2_b", "w1", "b1", "w2", "b2")


def _prepare_kernel_params(params, nhead, compute_dtype):
    """Host-side weight layout prep: dense pre-transposed weights, fused K/V, bf16 cast."""
    D = params["wo"].shape[0]
    f32 = jnp.float32
    wqkv = params["wqkv"]                      # (3D, D)  torch in_proj_weight
    bqkv = params["bqkv"]                      # (3D,)
    return {
        "ln1_g": params["ln1_g"].reshape(1, D).astype(f32),
        "ln1_b": params["ln1_b"].reshape(1, D).astype(f32),
        "wq": wqkv[:D].T.astype(compute_dtype),                 # (D, D)
        "bq": bqkv[:D].reshape(1, D).astype(f32),
        "wkv": wqkv[D:].T.astype(compute_dtype),                # (D, 2D) fused K|V
        "bkv": bqkv[D:].reshape(1, 2 * D).astype(f32),
        "wo": params["wo"].T.astype(compute_dtype),             # (D, D)
        "bo": params["bo"].reshape(1, D).astype(f32),
        "ln2_g": params["ln2_g"].reshape(1, D).astype(f32),
        "ln2_b": params["ln2_b"].reshape(1, D).astype(f32),
        "w1": params["w1"].T.astype(compute_dtype),             # (D, 4D)
        "b1": params["b1"].reshape(1, 4 * D).astype(f32),
        "w2": params["w2"].T.astype(compute_dtype),             # (4D, D)
        "b2": params["b2"].reshape(1, D).astype(f32),
    }


def cross_attention_layer(x, y, params, nhead, *,
                          compute_dtype=jnp.bfloat16, max_query_tile=256):
    B, Lq, D = x.shape
    _, Lk, _ = y.shape
    assert D % nhead == 0, "d_model must be divisible by nhead"
    hd = D // nhead
    out_dtype = x.dtype

    # Query-row tiling: grid = (B, Lq // TQ).  (Raise max_query_tile on 128 MiB-VMEM parts.)
    tq = Lq if Lq <= max_query_tile else max_query_tile
    assert Lq % tq == 0, "Lq must be divisible by the query tile size"
    n_qt = Lq // tq

    kparams = _prepare_kernel_params(params, nhead, compute_dtype)
    weights = [kparams[n] for n in _WEIGHT_ORDER]

    # Activations travel HBM->VMEM in bf16; halves DMA bytes for the largest operand (y).
    x_c = x.astype(compute_dtype)
    y_c = y.astype(compute_dtype)

    # Grid-invariant weights stay resident in VMEM for the whole call.
    w_spec = pl.BlockSpec(memory_space=pltpu.MemorySpace.VMEM)

    # Size-derived VMEM budget (weights + double-buffered IO + scratch + temporaries).
    csz = jnp.dtype(compute_dtype).itemsize
    weight_bytes = sum(int(w.size) * w.dtype.itemsize for w in weights)
    act_bytes = (2 * (tq + Lk) * D * csz          # double-buffered bf16 x / y blocks
                 + 2 * tq * D * 4                 # double-buffered f32 output block
                 + 2 * nhead * Lk * hd * csz      # persistent K/V scratch
                 + 2 * nhead * tq * Lk * 4        # scores + probs (f32)
                 + (2 * Lk * D + 12 * tq * D) * 4)  # LN / projection / FFN temporaries
    vmem_limit = int(min(100 * 2 ** 20, max(32 * 2 ** 20, 2 * (weight_bytes + act_bytes))))

    return pl.pallas_call(
        functools.partial(cross_attention_kernel, nhead=nhead),
        out_shape=jax.ShapeDtypeStruct((B, Lq, D), out_dtype),
        grid_spec=pltpu.PrefetchScalarGridSpec(
            num_scalar_prefetch=0,
            grid=(B, n_qt),
            in_specs=[
                pl.BlockSpec((1, tq, D), lambda b, qi: (b, qi, 0)),   # x query tile
                pl.BlockSpec((1, Lk, D), lambda b, qi: (b, 0, 0)),    # full y per batch
            ] + [w_spec] * len(weights),
            out_specs=pl.BlockSpec((1, tq, D), lambda b, qi: (b, qi, 0)),
            scratch_shapes=[
                pltpu.VMEM((nhead, Lk, hd), compute_dtype),   # K (head-major, bf16)
                pltpu.VMEM((nhead, Lk, hd), compute_dtype),   # V (head-major, bf16)
            ],
        ),
        compiler_params=pltpu.CompilerParams(
            # Batch axis parallel (megacore); qi axis arbitrary so the per-batch K/V
            # scratch carry across query tiles is valid.
            dimension_semantics=("parallel", "arbitrary"),
            vmem_limit_bytes=vmem_limit,
        ),
    )(x_c, y_c, *weights)


def make_params(key, d_model):
    ks = jax.random.split(key, 6)
    s = 0.05
    return {
        "ln1_g": jnp.ones((d_model,), jnp.float32),
        "ln1_b": jnp.zeros((d_model,), jnp.float32),
        "wqkv": s * jax.random.normal(ks[0], (3 * d_model, d_model), jnp.float32),
        "bqkv": s * jax.random.normal(ks[1], (3 * d_model,), jnp.float32),
        "wo": s * jax.random.normal(ks[2], (d_model, d_model), jnp.float32),
        "bo": s * jax.random.normal(ks[3], (d_model,), jnp.float32),
        "ln2_g": jnp.ones((d_model,), jnp.float32),
        "ln2_b": jnp.zeros((d_model,), jnp.float32),
        "w1": s * jax.random.normal(ks[4], (4 * d_model, d_model), jnp.float32),
        "b1": jnp.zeros((4 * d_model,), jnp.float32),
        "w2": s * jax.random.normal(ks[5], (d_model, 4 * d_model), jnp.float32),
        "b2": jnp.zeros((d_model,), jnp.float32),
    }


def reference(x, y, params, nhead, compute_dtype=jnp.bfloat16):
    """Pure-JAX forward of the module (eval-mode dropout), with the same matmul-input
    precision policy as the kernel (bf16 transport + bf16 MXU operands, f32 accumulation)."""
    D = x.shape[-1]
    hd = D // nhead
    scale = 1.0 / math.sqrt(hd)
    c = lambda a: a.astype(compute_dtype)
    f = lambda a: a.astype(jnp.float32)

    x = f(c(x))
    y = f(c(y))

    xn = _layernorm(x, params["ln1_g"], params["ln1_b"])
    yn = _layernorm(y, params["ln1_g"], params["ln1_b"])

    wqkv, bqkv = params["wqkv"], params["bqkv"]
    q = jnp.dot(c(xn), c(wqkv[:D].T), preferred_element_type=jnp.float32) + bqkv[:D]
    k = jnp.dot(c(yn), c(wqkv[D:2 * D].T), preferred_element_type=jnp.float32) + bqkv[D:2 * D]
    v = jnp.dot(c(yn), c(wqkv[2 * D:].T), preferred_element_type=jnp.float32) + bqkv[2 * D:]

    B, Lq, _ = q.shape
    Lk = k.shape[1]
    qh = q.reshape(B, Lq, nhead, hd)
    kh = k.reshape(B, Lk, nhead, hd)
    vh = v.reshape(B, Lk, nhead, hd)
    s = jnp.einsum("bqhc,bkhc->bhqk", c(qh * scale), c(kh),
                   preferred_element_type=jnp.float32)
    p = jax.nn.softmax(s, axis=-1)
    o = jnp.einsum("bhqk,bkhc->bqhc", c(p), c(vh),
                   preferred_element_type=jnp.float32).reshape(B, Lq, D)

    attn = jnp.dot(c(o), c(params["wo"].T), preferred_element_type=jnp.float32) + params["bo"]
    xr = xn + attn
    xn2 = _layernorm(xr, params["ln2_g"], params["ln2_b"])
    h1 = jax.nn.relu(jnp.dot(c(xn2), c(params["w1"].T),
                             preferred_element_type=jnp.float32) + params["b1"])
    ff = jnp.dot(c(h1), c(params["w2"].T),
                 preferred_element_type=jnp.float32) + params["b2"]
    return xn2 + ff


if __name__ == "__main__":
    B, L, d_model, nhead = 2, 8, 32, 4
    key = jax.random.PRNGKey(0)
    kx, ky, kp = jax.random.split(key, 3)
    x = jax.random.normal(kx, (B, L, d_model), jnp.float32)
    y = jax.random.normal(ky, (B, L, d_model), jnp.float32)
    params = make_params(kp, d_model)

    out = jax.block_until_ready(cross_attention_layer(x, y, params, nhead))

    with jax.default_matmul_precision("highest"):
        ref = jax.block_until_ready(reference(x, y, params, nhead))

    np.testing.assert_allclose(np.asarray(out), np.asarray(ref), rtol=2e-2, atol=2e-2)
    print("KERNEL_OK")
</pallas_src>

<mosaic_0001>
module attributes {stable_mosaic.version = 11 : i64} {
  func.func @cross_attention_kernel(%arg0: i32, %arg1: i32, %arg2: memref<1x8x32xbf16, #tpu.memory_space<vmem>>, %arg3: memref<1x8x32xbf16, #tpu.memory_space<vmem>>, %arg4: memref<1x32xf32, #tpu.memory_space<vmem>>, %arg5: memref<1x32xf32, #tpu.memory_space<vmem>>, %arg6: memref<32x32xbf16, #tpu.memory_space<vmem>>, %arg7: memref<1x32xf32, #tpu.memory_space<vmem>>, %arg8: memref<32x64xbf16, #tpu.memory_space<vmem>>, %arg9: memref<1x64xf32, #tpu.memory_space<vmem>>, %arg10: memref<32x32xbf16, #tpu.memory_space<vmem>>, %arg11: memref<1x32xf32, #tpu.memory_space<vmem>>, %arg12: memref<1x32xf32, #tpu.memory_space<vmem>>, %arg13: memref<1x32xf32, #tpu.memory_space<vmem>>, %arg14: memref<32x128xbf16, #tpu.memory_space<vmem>>, %arg15: memref<1x128xf32, #tpu.memory_space<vmem>>, %arg16: memref<128x32xbf16, #tpu.memory_space<vmem>>, %arg17: memref<1x32xf32, #tpu.memory_space<vmem>>, %arg18: memref<1x8x32xf32, #tpu.memory_space<vmem>>, %arg19: memref<4x8x8xbf16, #tpu.memory_space<vmem>>, %arg20: memref<4x8x8xbf16, #tpu.memory_space<vmem>>) attributes {dimension_semantics = [#tpu.dimension_semantics<parallel>, #tpu.dimension_semantics<arbitrary>], iteration_bounds = array<i64: 2, 1>, scalar_prefetch = 0 : i64, scratch_operands = 2 : i64, tpu.core_type = #tpu.core_type<tc>, window_params = [{transform_indices = @transform_0, window_bounds = array<i64: 1, 8, 32>}, {transform_indices = @transform_1, window_bounds = array<i64: 1, 8, 32>}, {pipeline_mode = #tpu.pipeline_mode<synchronous>, transform_indices = @transform_2, window_bounds = array<i64: 1, 32>}, {pipeline_mode = #tpu.pipeline_mode<synchronous>, transform_indices = @transform_3, window_bounds = array<i64: 1, 32>}, {pipeline_mode = #tpu.pipeline_mode<synchronous>, transform_indices = @transform_4, window_bounds = array<i64: 32, 32>}, {pipeline_mode = #tpu.pipeline_mode<synchronous>, transform_indices = @transform_5, window_bounds = array<i64: 1, 32>}, {pipeline_mode = #tpu.pipeline_mode<synchronous>, transform_indices = @transform_6, window_bounds = array<i64: 32, 64>}, {pipeline_mode = #tpu.pipeline_mode<synchronous>, transform_indices = @transform_7, window_bounds = array<i64: 1, 64>}, {pipeline_mode = #tpu.pipeline_mode<synchronous>, transform_indices = @transform_8, window_bounds = array<i64: 32, 32>}, {pipeline_mode = #tpu.pipeline_mode<synchronous>, transform_indices = @transform_9, window_bounds = array<i64: 1, 32>}, {pipeline_mode = #tpu.pipeline_mode<synchronous>, transform_indices = @transform_10, window_bounds = array<i64: 1, 32>}, {pipeline_mode = #tpu.pipeline_mode<synchronous>, transform_indices = @transform_11, window_bounds = array<i64: 1, 32>}, {pipeline_mode = #tpu.pipeline_mode<synchronous>, transform_indices = @transform_12, window_bounds = array<i64: 32, 128>}, {pipeline_mode = #tpu.pipeline_mode<synchronous>, transform_indices = @transform_13, window_bounds = array<i64: 1, 128>}, {pipeline_mode = #tpu.pipeline_mode<synchronous>, transform_indices = @transform_14, window_bounds = array<i64: 128, 32>}, {pipeline_mode = #tpu.pipeline_mode<synchronous>, transform_indices = @transform_15, window_bounds = array<i64: 1, 32>}, {transform_indices = @transform_16, window_bounds = array<i64: 1, 8, 32>}]} {
    %c0 = arith.constant 0 : index
    %c0_0 = arith.constant 0 : index
    %0 = vector.load %arg4[%c0, %c0_0] : memref<1x32xf32, #tpu.memory_space<vmem>>, vector<1x32xf32>
    %1 = vector.shape_cast %0 : vector<1x32xf32> to vector<32xf32>
    %c0_1 = arith.constant 0 : index
    %c0_2 = arith.constant 0 : index
    %2 = vector.load %arg5[%c0_1, %c0_2] : memref<1x32xf32, #tpu.memory_space<vmem>>, vector<1x32xf32>
    %3 = vector.shape_cast %2 : vector<1x32xf32> to vector<32xf32>
    %c0_i32 = arith.constant 0 : i32
    %4 = arith.cmpi eq, %arg1, %c0_i32 : i32
    %5 = arith.extui %4 : i1 to i32
    %c0_i32_3 = arith.constant 0 : i32
    %6 = arith.cmpi ne, %5, %c0_i32_3 : i32
    scf.if %6 {
      %c0_55 = arith.constant 0 : index
      %c0_56 = arith.constant 0 : index
      %c0_57 = arith.constant 0 : index
      %137 = vector.load %arg3[%c0_55, %c0_56, %c0_57] : memref<1x8x32xbf16, #tpu.memory_space<vmem>>, vector<1x8x32xbf16>
      %138 = vector.shape_cast %137 : vector<1x8x32xbf16> to vector<8x32xbf16>
      %139 = arith.extf %138 : vector<8x32xbf16> to vector<8x32xf32>
      %cst_58 = arith.constant dense<0.000000e+00> : vector<8xf32>
      %140 = vector.multi_reduction <add>, %139, %cst_58 [1] : vector<8x32xf32> to vector<8xf32>
      %141 = vector.shape_cast %140 : vector<8xf32> to vector<8x1xf32>
      %cst_59 = arith.constant 3.200000e+01 : f32
      %142 = vector.broadcast %cst_59 : f32 to vector<8x1xf32>
      %143 = arith.divf %141, %142 : vector<8x1xf32>
      %144 = vector.broadcast %143 : vector<8x1xf32> to vector<8x32xf32>
      %145 = arith.subf %139, %144 : vector<8x32xf32>
      %146 = arith.mulf %145, %145 : vector<8x32xf32>
      %cst_60 = arith.constant dense<0.000000e+00> : vector<8xf32>
      %147 = vector.multi_reduction <add>, %146, %cst_60 [1] : vector<8x32xf32> to vector<8xf32>
      %148 = vector.shape_cast %147 : vector<8xf32> to vector<8x1xf32>
      %cst_61 = arith.constant 3.200000e+01 : f32
      %149 = vector.broadcast %cst_61 : f32 to vector<8x1xf32>
      %150 = arith.divf %148, %149 : vector<8x1xf32>
      %151 = vector.broadcast %143 : vector<8x1xf32> to vector<8x32xf32>
      %152 = arith.subf %139, %151 : vector<8x32xf32>
      %cst_62 = arith.constant 9.99999974E-6 : f32
      %153 = vector.broadcast %cst_62 : f32 to vector<8x1xf32>
      %154 = arith.addf %150, %153 : vector<8x1xf32>
      %155 = math.rsqrt %154 : vector<8x1xf32>
      %156 = vector.broadcast %155 : vector<8x1xf32> to vector<8x32xf32>
      %157 = arith.mulf %152, %156 : vector<8x32xf32>
      %158 = vector.shape_cast %1 : vector<32xf32> to vector<1x32xf32>
      %159 = vector.broadcast %158 : vector<1x32xf32> to vector<8x32xf32>
      %160 = arith.mulf %157, %159 : vector<8x32xf32>
      %161 = vector.shape_cast %3 : vector<32xf32> to vector<1x32xf32>
      %162 = vector.broadcast %161 : vector<1x32xf32> to vector<8x32xf32>
      %163 = arith.addf %160, %162 : vector<8x32xf32>
      %164 = arith.truncf %163 : vector<8x32xf32> to vector<8x32xbf16>
      %c0_63 = arith.constant 0 : index
      %c0_64 = arith.constant 0 : index
      %165 = vector.load %arg8[%c0_63, %c0_64] : memref<32x64xbf16, #tpu.memory_space<vmem>>, vector<32x64xbf16>
      %cst_65 = arith.constant dense<0.000000e+00> : vector<8x64xf32>
      %166 = tpu.matmul %164, %165, %cst_65 {dimension_numbers = #tpu.dot_dimension_numbers<[1], [0], [0], [1], [0, 0, 1, 1], [], []>} : vector<8x32xbf16>, vector<32x64xbf16>, vector<8x64xf32> -> vector<8x64xf32>
      %c0_66 = arith.constant 0 : index
      %c0_67 = arith.constant 0 : index
      %167 = vector.load %arg9[%c0_66, %c0_67] : memref<1x64xf32, #tpu.memory_space<vmem>>, vector<1x64xf32>
      %168 = vector.shape_cast %167 : vector<1x64xf32> to vector<64xf32>
      %169 = vector.shape_cast %168 : vector<64xf32> to vector<1x64xf32>
      %170 = vector.broadcast %169 : vector<1x64xf32> to vector<8x64xf32>
      %171 = arith.addf %166, %170 : vector<8x64xf32>
      %172 = vector.extract_strided_slice %171 {offsets = [0, 0], sizes = [8, 8], strides = [1, 1]} : vector<8x64xf32> to vector<8x8xf32>
      %173 = arith.truncf %172 : vector<8x8xf32> to vector<8x8xbf16>
      %c0_68 = arith.constant 0 : index
      %c0_69 = arith.constant 0 : index
      %c0_70 = arith.constant 0 : index
      %174 = vector.load %arg19[%c0_68, %c0_69, %c0_70] : memref<4x8x8xbf16, #tpu.memory_space<vmem>>, vector<1x8x8xbf16>
      %175 = vector.shape_cast %174 : vector<1x8x8xbf16> to vector<8x8xbf16>
      %176 = vector.shape_cast %173 : vector<8x8xbf16> to vector<1x8x8xbf16>
      tpu.vector_store %arg19[%c0_68, %c0_69, %c0_70], %176 {strides = array<i32>} : memref<4x8x8xbf16, #tpu.memory_space<vmem>>, vector<1x8x8xbf16>,
      %177 = vector.extract_strided_slice %171 {offsets = [0, 32], sizes = [8, 8], strides = [1, 1]} : vector<8x64xf32> to vector<8x8xf32>
      %178 = arith.truncf %177 : vector<8x8xf32> to vector<8x8xbf16>
      %c0_71 = arith.constant 0 : index
      %c0_72 = arith.constant 0 : index
      %c0_73 = arith.constant 0 : index
      %179 = vector.load %arg20[%c0_71, %c0_72, %c0_73] : memref<4x8x8xbf16, #tpu.memory_space<vmem>>, vector<1x8x8xbf16>
      %180 = vector.shape_cast %179 : vector<1x8x8xbf16> to vector<8x8xbf16>
      %181 = vector.shape_cast %178 : vector<8x8xbf16> to vector<1x8x8xbf16>
      tpu.vector_store %arg20[%c0_71, %c0_72, %c0_73], %181 {strides = array<i32>} : memref<4x8x8xbf16, #tpu.memory_space<vmem>>, vector<1x8x8xbf16>,
      %182 = vector.extract_strided_slice %171 {offsets = [0, 8], sizes = [8, 8], strides = [1, 1]} : vector<8x64xf32> to vector<8x8xf32>
      %183 = arith.truncf %182 : vector<8x8xf32> to vector<8x8xbf16>
      %c1 = arith.constant 1 : index
      %c0_74 = arith.constant 0 : index
      %c0_75 = arith.constant 0 : index
      %184 = vector.load %arg19[%c1, %c0_74, %c0_75] : memref<4x8x8xbf16, #tpu.memory_space<vmem>>, vector<1x8x8xbf16>
      %185 = vector.shape_cast %184 : vector<1x8x8xbf16> to vector<8x8xbf16>
      %186 = vector.shape_cast %183 : vector<8x8xbf16> to vector<1x8x8xbf16>
      tpu.vector_store %arg19[%c1, %c0_74, %c0_75], %186 {strides = array<i32>} : memref<4x8x8xbf16, #tpu.memory_space<vmem>>, vector<1x8x8xbf16>,
      %187 = vector.extract_strided_slice %171 {offsets = [0, 40], sizes = [8, 8], strides = [1, 1]} : vector<8x64xf32> to vector<8x8xf32>
      %188 = arith.truncf %187 : vector<8x8xf32> to vector<8x8xbf16>
      %c1_76 = arith.constant 1 : index
      %c0_77 = arith.constant 0 : index
      %c0_78 = arith.constant 0 : index
      %189 = vector.load %arg20[%c1_76, %c0_77, %c0_78] : memref<4x8x8xbf16, #tpu.memory_space<vmem>>, vector<1x8x8xbf16>
      %190 = vector.shape_cast %189 : vector<1x8x8xbf16> to vector<8x8xbf16>
      %191 = vector.shape_cast %188 : vector<8x8xbf16> to vector<1x8x8xbf16>
      tpu.vector_store %arg20[%c1_76, %c0_77, %c0_78], %191 {strides = array<i32>} : memref<4x8x8xbf16, #tpu.memory_space<vmem>>, vector<1x8x8xbf16>,
      %192 = vector.extract_strided_slice %171 {offsets = [0, 16], sizes = [8, 8], strides = [1, 1]} : vector<8x64xf32> to vector<8x8xf32>
      %193 = arith.truncf %192 : vector<8x8xf32> to vector<8x8xbf16>
      %c2 = arith.constant 2 : index
      %c0_79 = arith.constant 0 : index
      %c0_80 = arith.constant 0 : index
      %194 = vector.load %arg19[%c2, %c0_79, %c0_80] : memref<4x8x8xbf16, #tpu.memory_space<vmem>>, vector<1x8x8xbf16>
      %195 = vector.shape_cast %194 : vector<1x8x8xbf16> to vector<8x8xbf16>
      %196 = vector.shape_cast %193 : vector<8x8xbf16> to vector<1x8x8xbf16>
      tpu.vector_store %arg19[%c2, %c0_79, %c0_80], %196 {strides = array<i32>} : memref<4x8x8xbf16, #tpu.memory_space<vmem>>, vector<1x8x8xbf16>,
      %197 = vector.extract_strided_slice %171 {offsets = [0, 48], sizes = [8, 8], strides = [1, 1]} : vector<8x64xf32> to vector<8x8xf32>
      %198 = arith.truncf %197 : vector<8x8xf32> to vector<8x8xbf16>
      %c2_81 = arith.constant 2 : index
      %c0_82 = arith.constant 0 : index
      %c0_83 = arith.constant 0 : index
      %199 = vector.load %arg20[%c2_81, %c0_82, %c0_83] : memref<4x8x8xbf16, #tpu.memory_space<vmem>>, vector<1x8x8xbf16>
      %200 = vector.shape_cast %199 : vector<1x8x8xbf16> to vector<8x8xbf16>
      %201 = vector.shape_cast %198 : vector<8x8xbf16> to vector<1x8x8xbf16>
      tpu.vector_store %arg20[%c2_81, %c0_82, %c0_83], %201 {strides = array<i32>} : memref<4x8x8xbf16, #tpu.memory_space<vmem>>, vector<1x8x8xbf16>,
      %202 = vector.extract_strided_slice %171 {offsets = [0, 24], sizes = [8, 8], strides = [1, 1]} : vector<8x64xf32> to vector<8x8xf32>
      %203 = arith.truncf %202 : vector<8x8xf32> to vector<8x8xbf16>
      %c3 = arith.constant 3 : index
      %c0_84 = arith.constant 0 : index
      %c0_85 = arith.constant 0 : index
      %204 = vector.load %arg19[%c3, %c0_84, %c0_85] : memref<4x8x8xbf16, #tpu.memory_space<vmem>>, vector<1x8x8xbf16>
      %205 = vector.shape_cast %204 : vector<1x8x8xbf16> to vector<8x8xbf16>
      %206 = vector.shape_cast %203 : vector<8x8xbf16> to vector<1x8x8xbf16>
      tpu.vector_store %arg19[%c3, %c0_84, %c0_85], %206 {strides = array<i32>} : memref<4x8x8xbf16, #tpu.memory_space<vmem>>, vector<1x8x8xbf16>,
      %207 = vector.extract_strided_slice %171 {offsets = [0, 56], sizes = [8, 8], strides = [1, 1]} : vector<8x64xf32> to vector<8x8xf32>
      %208 = arith.truncf %207 : vector<8x8xf32> to vector<8x8xbf16>
      %c3_86 = arith.constant 3 : index
      %c0_87 = arith.constant 0 : index
      %c0_88 = arith.constant 0 : index
      %209 = vector.load %arg20[%c3_86, %c0_87, %c0_88] : memref<4x8x8xbf16, #tpu.memory_space<vmem>>, vector<1x8x8xbf16>
      %210 = vector.shape_cast %209 : vector<1x8x8xbf16> to vector<8x8xbf16>
      %211 = vector.shape_cast %208 : vector<8x8xbf16> to vector<1x8x8xbf16>
      tpu.vector_store %arg20[%c3_86, %c0_87, %c0_88], %211 {strides = array<i32>} : memref<4x8x8xbf16, #tpu.memory_space<vmem>>, vector<1x8x8xbf16>,
    } else {
    }
    %c0_4 = arith.constant 0 : index
    %c0_5 = arith.constant 0 : index
    %c0_6 = arith.constant 0 : index
    %7 = vector.load %arg2[%c0_4, %c0_5, %c0_6] : memref<1x8x32xbf16, #tpu.memory_space<vmem>>, vector<1x8x32xbf16>
    %8 = vector.shape_cast %7 : vector<1x8x32xbf16> to vector<8x32xbf16>
    %9 = arith.extf %8 : vector<8x32xbf16> to vector<8x32xf32>
    %cst = arith.constant dense<0.000000e+00> : vector<8xf32>
    %10 = vector.multi_reduction <add>, %9, %cst [1] : vector<8x32xf32> to vector<8xf32>
    %11 = vector.shape_cast %10 : vector<8xf32> to vector<8x1xf32>
    %cst_7 = arith.constant 3.200000e+01 : f32
    %12 = vector.broadcast %cst_7 : f32 to vector<8x1xf32>
    %13 = arith.divf %11, %12 : vector<8x1xf32>
    %14 = vector.broadcast %13 : vector<8x1xf32> to vector<8x32xf32>
    %15 = arith.subf %9, %14 : vector<8x32xf32>
    %16 = arith.mulf %15, %15 : vector<8x32xf32>
    %cst_8 = arith.constant dense<0.000000e+00> : vector<8xf32>
    %17 = vector.multi_reduction <add>, %16, %cst_8 [1] : vector<8x32xf32> to vector<8xf32>
    %18 = vector.shape_cast %17 : vector<8xf32> to vector<8x1xf32>
    %cst_9 = arith.constant 3.200000e+01 : f32
    %19 = vector.broadcast %cst_9 : f32 to vector<8x1xf32>
    %20 = arith.divf %18, %19 : vector<8x1xf32>
    %21 = vector.broadcast %13 : vector<8x1xf32> to vector<8x32xf32>
    %22 = arith.subf %9, %21 : vector<8x32xf32>
    %cst_10 = arith.constant 9.99999974E-6 : f32
    %23 = vector.broadcast %cst_10 : f32 to vector<8x1xf32>
    %24 = arith.addf %20, %23 : vector<8x1xf32>
    %25 = math.rsqrt %24 : vector<8x1xf32>
    %26 = vector.broadcast %25 : vector<8x1xf32> to vector<8x32xf32>
    %27 = arith.mulf %22, %26 : vector<8x32xf32>
    %28 = vector.shape_cast %1 : vector<32xf32> to vector<1x32xf32>
    %29 = vector.broadcast %28 : vector<1x32xf32> to vector<8x32xf32>
    %30 = arith.mulf %27, %29 : vector<8x32xf32>
    %31 = vector.shape_cast %3 : vector<32xf32> to vector<1x32xf32>
    %32 = vector.broadcast %31 : vector<1x32xf32> to vector<8x32xf32>
    %33 = arith.addf %30, %32 : vector<8x32xf32>
    %34 = arith.truncf %33 : vector<8x32xf32> to vector<8x32xbf16>
    %c0_11 = arith.constant 0 : index
    %c0_12 = arith.constant 0 : index
    %35 = vector.load %arg6[%c0_11, %c0_12] : memref<32x32xbf16, #tpu.memory_space<vmem>>, vector<32x32xbf16>
    %cst_13 = arith.constant dense<0.000000e+00> : vector<8x32xf32>
    %36 = tpu.matmul %34, %35, %cst_13 {dimension_numbers = #tpu.dot_dimension_numbers<[1], [0], [0], [1], [0, 0, 1, 1], [], []>} : vector<8x32xbf16>, vector<32x32xbf16>, vector<8x32xf32> -> vector<8x32xf32>
    %c0_14 = arith.constant 0 : index
    %c0_15 = arith.constant 0 : index
    %37 = vector.load %arg7[%c0_14, %c0_15] : memref<1x32xf32, #tpu.memory_space<vmem>>, vector<1x32xf32>
    %38 = vector.shape_cast %37 : vector<1x32xf32> to vector<32xf32>
    %39 = vector.shape_cast %38 : vector<32xf32> to vector<1x32xf32>
    %40 = vector.broadcast %39 : vector<1x32xf32> to vector<8x32xf32>
    %41 = arith.addf %36, %40 : vector<8x32xf32>
    %cst_16 = arith.constant 0.353553385 : f32
    %42 = vector.broadcast %cst_16 : f32 to vector<8x32xf32>
    %43 = arith.mulf %41, %42 : vector<8x32xf32>
    %44 = arith.truncf %43 : vector<8x32xf32> to vector<8x32xbf16>
    %45 = vector.extract_strided_slice %44 {offsets = [0, 0], sizes = [8, 8], strides = [1, 1]} : vector<8x32xbf16> to vector<8x8xbf16>
    %46 = vector.extract_strided_slice %44 {offsets = [0, 8], sizes = [8, 8], strides = [1, 1]} : vector<8x32xbf16> to vector<8x8xbf16>
    %47 = vector.extract_strided_slice %44 {offsets = [0, 16], sizes = [8, 8], strides = [1, 1]} : vector<8x32xbf16> to vector<8x8xbf16>
    %48 = vector.extract_strided_slice %44 {offsets = [0, 24], sizes = [8, 8], strides = [1, 1]} : vector<8x32xbf16> to vector<8x8xbf16>
    %49 = vector.shape_cast %45 : vector<8x8xbf16> to vector<1x8x8xbf16>
    %50 = vector.shape_cast %46 : vector<8x8xbf16> to vector<1x8x8xbf16>
    %51 = vector.shape_cast %47 : vector<8x8xbf16> to vector<1x8x8xbf16>
    %52 = vector.shape_cast %48 : vector<8x8xbf16> to vector<1x8x8xbf16>
    %53 = tpu.concatenate %49, %50, %51, %52 in 0 : vector<1x8x8xbf16>, vector<1x8x8xbf16>, vector<1x8x8xbf16>, vector<1x8x8xbf16> -> vector<4x8x8xbf16>
    %c0_17 = arith.constant 0 : index
    %c0_18 = arith.constant 0 : index
    %c0_19 = arith.constant 0 : index
    %54 = vector.load %arg19[%c0_17, %c0_18, %c0_19] : memref<4x8x8xbf16, #tpu.memory_space<vmem>>, vector<4x8x8xbf16>
    %c0_20 = arith.constant 0 : index
    %c0_21 = arith.constant 0 : index
    %c0_22 = arith.constant 0 : index
    %55 = vector.load %arg20[%c0_20, %c0_21, %c0_22] : memref<4x8x8xbf16, #tpu.memory_space<vmem>>, vector<4x8x8xbf16>
    %cst_23 = arith.constant dense<0.000000e+00> : vector<4x8x8xf32>
    %56 = tpu.matmul %53, %54, %cst_23 {dimension_numbers = #tpu.dot_dimension_numbers<[2], [2], [1], [1], [0, 0, 0, 1, 1, 1], [0], [0]>} : vector<4x8x8xbf16>, vector<4x8x8xbf16>, vector<4x8x8xf32> -> vector<4x8x8xf32>
    %cst_24 = arith.constant dense<0xFF800000> : vector<4x8xf32>
    %57 = vector.multi_reduction <maximumf>, %56, %cst_24 [2] : vector<4x8x8xf32> to vector<4x8xf32>
    %58 = vector.shape_cast %57 : vector<4x8xf32> to vector<4x8x1xf32>
    %59 = vector.broadcast %58 : vector<4x8x1xf32> to vector<4x8x8xf32>
    %60 = arith.subf %56, %59 : vector<4x8x8xf32>
    %61 = math.exp %60 : vector<4x8x8xf32>
    %cst_25 = arith.constant dense<0.000000e+00> : vector<4x8xf32>
    %62 = vector.multi_reduction <add>, %61, %cst_25 [2] : vector<4x8x8xf32> to vector<4x8xf32>
    %63 = vector.shape_cast %62 : vector<4x8xf32> to vector<4x8x1xf32>
    %64 = tpu.reciprocal %63 {approx = true} : vector<4x8x1xf32> -> vector<4x8x1xf32>
    %65 = vector.broadcast %64 : vector<4x8x1xf32> to vector<4x8x8xf32>
    %66 = arith.mulf %61, %65 : vector<4x8x8xf32>
    %67 = arith.truncf %66 : vector<4x8x8xf32> to vector<4x8x8xbf16>
    %cst_26 = arith.constant dense<0.000000e+00> : vector<4x8x8xf32>
    %68 = tpu.matmul %67, %55, %cst_26 {dimension_numbers = #tpu.dot_dimension_numbers<[2], [1], [1], [2], [0, 0, 0, 1, 1, 2], [0], [0]>} : vector<4x8x8xbf16>, vector<4x8x8xbf16>, vector<4x8x8xf32> -> vector<4x8x8xf32>
    %69 = vector.extract_strided_slice %68 {offsets = [0, 0, 0], sizes = [1, 8, 8], strides = [1, 1, 1]} : vector<4x8x8xf32> to vector<1x8x8xf32>
    %70 = vector.shape_cast %69 : vector<1x8x8xf32> to vector<8x8xf32>
    %71 = vector.extract_strided_slice %68 {offsets = [1, 0, 0], sizes = [1, 8, 8], strides = [1, 1, 1]} : vector<4x8x8xf32> to vector<1x8x8xf32>
    %72 = vector.shape_cast %71 : vector<1x8x8xf32> to vector<8x8xf32>
    %73 = vector.extract_strided_slice %68 {offsets = [2, 0, 0], sizes = [1, 8, 8], strides = [1, 1, 1]} : vector<4x8x8xf32> to vector<1x8x8xf32>
    %74 = vector.shape_cast %73 : vector<1x8x8xf32> to vector<8x8xf32>
    %75 = vector.extract_strided_slice %68 {offsets = [3, 0, 0], sizes = [1, 8, 8], strides = [1, 1, 1]} : vector<4x8x8xf32> to vector<1x8x8xf32>
    %76 = vector.shape_cast %75 : vector<1x8x8xf32> to vector<8x8xf32>
    %77 = tpu.concatenate %70, %72, %74, %76 in 1 : vector<8x8xf32>, vector<8x8xf32>, vector<8x8xf32>, vector<8x8xf32> -> vector<8x32xf32>
    %78 = arith.truncf %77 : vector<8x32xf32> to vector<8x32xbf16>
    %c0_27 = arith.constant 0 : index
    %c0_28 = arith.constant 0 : index
    %79 = vector.load %arg10[%c0_27, %c0_28] : memref<32x32xbf16, #tpu.memory_space<vmem>>, vector<32x32xbf16>
    %cst_29 = arith.constant dense<0.000000e+00> : vector<8x32xf32>
    %80 = tpu.matmul %78, %79, %cst_29 {dimension_numbers = #tpu.dot_dimension_numbers<[1], [0], [0], [1], [0, 0, 1, 1], [], []>} : vector<8x32xbf16>, vector<32x32xbf16>, vector<8x32xf32> -> vector<8x32xf32>
    %c0_30 = arith.constant 0 : index
    %c0_31 = arith.constant 0 : index
    %81 = vector.load %arg11[%c0_30, %c0_31] : memref<1x32xf32, #tpu.memory_space<vmem>>, vector<1x32xf32>
    %82 = vector.shape_cast %81 : vector<1x32xf32> to vector<32xf32>
    %83 = vector.shape_cast %82 : vector<32xf32> to vector<1x32xf32>
    %84 = vector.broadcast %83 : vector<1x32xf32> to vector<8x32xf32>
    %85 = arith.addf %80, %84 : vector<8x32xf32>
    %86 = arith.addf %33, %85 : vector<8x32xf32>
    %c0_32 = arith.constant 0 : index
    %c0_33 = arith.constant 0 : index
    %87 = vector.load %arg12[%c0_32, %c0_33] : memref<1x32xf32, #tpu.memory_space<vmem>>, vector<1x32xf32>
    %88 = vector.shape_cast %87 : vector<1x32xf32> to vector<32xf32>
    %c0_34 = arith.constant 0 : index
    %c0_35 = arith.constant 0 : index
    %89 = vector.load %arg13[%c0_34, %c0_35] : memref<1x32xf32, #tpu.memory_space<vmem>>, vector<1x32xf32>
    %90 = vector.shape_cast %89 : vector<1x32xf32> to vector<32xf32>
    %cst_36 = arith.constant dense<0.000000e+00> : vector<8xf32>
    %91 = vector.multi_reduction <add>, %86, %cst_36 [1] : vector<8x32xf32> to vector<8xf32>
    %92 = vector.shape_cast %91 : vector<8xf32> to vector<8x1xf32>
    %cst_37 = arith.constant 3.200000e+01 : f32
    %93 = vector.broadcast %cst_37 : f32 to vector<8x1xf32>
    %94 = arith.divf %92, %93 : vector<8x1xf32>
    %95 = vector.broadcast %94 : vector<8x1xf32> to vector<8x32xf32>
    %96 = arith.subf %86, %95 : vector<8x32xf32>
    %97 = arith.mulf %96, %96 : vector<8x32xf32>
    %cst_38 = arith.constant dense<0.000000e+00> : vector<8xf32>
    %98 = vector.multi_reduction <add>, %97, %cst_38 [1] : vector<8x32xf32> to vector<8xf32>
    %99 = vector.shape_cast %98 : vector<8xf32> to vector<8x1xf32>
    %cst_39 = arith.constant 3.200000e+01 : f32
    %100 = vector.broadcast %cst_39 : f32 to vector<8x1xf32>
    %101 = arith.divf %99, %100 : vector<8x1xf32>
    %102 = vector.broadcast %94 : vector<8x1xf32> to vector<8x32xf32>
    %103 = arith.subf %86, %102 : vector<8x32xf32>
    %cst_40 = arith.constant 9.99999974E-6 : f32
    %104 = vector.broadcast %cst_40 : f32 to vector<8x1xf32>
    %105 = arith.addf %101, %104 : vector<8x1xf32>
    %106 = math.rsqrt %105 : vector<8x1xf32>
    %107 = vector.broadcast %106 : vector<8x1xf32> to vector<8x32xf32>
    %108 = arith.mulf %103, %107 : vector<8x32xf32>
    %109 = vector.shape_cast %88 : vector<32xf32> to vector<1x32xf32>
    %110 = vector.broadcast %109 : vector<1x32xf32> to vector<8x32xf32>
    %111 = arith.mulf %108, %110 : vector<8x32xf32>
    %112 = vector.shape_cast %90 : vector<32xf32> to vector<1x32xf32>
    %113 = vector.broadcast %112 : vector<1x32xf32> to vector<8x32xf32>
    %114 = arith.addf %111, %113 : vector<8x32xf32>
    %115 = arith.truncf %114 : vector<8x32xf32> to vector<8x32xbf16>
    %c0_41 = arith.constant 0 : index
    %c0_42 = arith.constant 0 : index
    %116 = vector.load %arg14[%c0_41, %c0_42] : memref<32x128xbf16, #tpu.memory_space<vmem>>, vector<32x128xbf16>
    %cst_43 = arith.constant dense<0.000000e+00> : vector<8x128xf32>
    %117 = tpu.matmul %115, %116, %cst_43 {dimension_numbers = #tpu.dot_dimension_numbers<[1], [0], [0], [1], [0, 0, 1, 1], [], []>} : vector<8x32xbf16>, vector<32x128xbf16>, vector<8x128xf32> -> vector<8x128xf32>
    %c0_44 = arith.constant 0 : index
    %c0_45 = arith.constant 0 : index
    %118 = vector.load %arg15[%c0_44, %c0_45] : memref<1x128xf32, #tpu.memory_space<vmem>>, vector<1x128xf32>
    %119 = vector.shape_cast %118 : vector<1x128xf32> to vector<128xf32>
    %120 = vector.shape_cast %119 : vector<128xf32> to vector<1x128xf32>
    %121 = vector.broadcast %120 : vector<1x128xf32> to vector<8x128xf32>
    %122 = arith.addf %117, %121 : vector<8x128xf32>
    %cst_46 = arith.constant 0.000000e+00 : f32
    %123 = vector.broadcast %cst_46 : f32 to vector<8x128xf32>
    %124 = arith.maximumf %122, %123 : vector<8x128xf32>
    %125 = arith.truncf %124 : vector<8x128xf32> to vector<8x128xbf16>
    %c0_47 = arith.constant 0 : index
    %c0_48 = arith.constant 0 : index
    %126 = vector.load %arg16[%c0_47, %c0_48] : memref<128x32xbf16, #tpu.memory_space<vmem>>, vector<128x32xbf16>
    %cst_49 = arith.constant dense<0.000000e+00> : vector<8x32xf32>
    %127 = tpu.matmul %125, %126, %cst_49 {dimension_numbers = #tpu.dot_dimension_numbers<[1], [0], [0], [1], [0, 0, 1, 1], [], []>} : vector<8x128xbf16>, vector<128x32xbf16>, vector<8x32xf32> -> vector<8x32xf32>
    %c0_50 = arith.constant 0 : index
    %c0_51 = arith.constant 0 : index
    %128 = vector.load %arg17[%c0_50, %c0_51] : memref<1x32xf32, #tpu.memory_space<vmem>>, vector<1x32xf32>
    %129 = vector.shape_cast %128 : vector<1x32xf32> to vector<32xf32>
    %130 = vector.shape_cast %129 : vector<32xf32> to vector<1x32xf32>
    %131 = vector.broadcast %130 : vector<1x32xf32> to vector<8x32xf32>
    %132 = arith.addf %127, %131 : vector<8x32xf32>
    %133 = arith.addf %114, %132 : vector<8x32xf32>
    %c0_52 = arith.constant 0 : index
    %c0_53 = arith.constant 0 : index
    %c0_54 = arith.constant 0 : index
    %134 = vector.load %arg18[%c0_52, %c0_53, %c0_54] : memref<1x8x32xf32, #tpu.memory_space<vmem>>, vector<1x8x32xf32>
    %135 = vector.shape_cast %134 : vector<1x8x32xf32> to vector<8x32xf32>
    %136 = vector.shape_cast %133 : vector<8x32xf32> to vector<1x8x32xf32>
    tpu.vector_store %arg18[%c0_52, %c0_53, %c0_54], %136 {strides = array<i32>} : memref<1x8x32xf32, #tpu.memory_space<vmem>>, vector<1x8x32xf32>,
    return
  }
  func.func @transform_0(%arg0: i32, %arg1: i32) -> (i32, i32, i32) {
    %c0_i32 = arith.constant 0 : i32
    %c0_i32_0 = arith.constant 0 : i32
    return %arg0, %arg1, %c0_i32 : i32, i32, i32
  }
  func.func @transform_1(%arg0: i32, %arg1: i32) -> (i32, i32, i32) {
    %c0_i32 = arith.constant 0 : i32
    %c0_i32_0 = arith.constant 0 : i32
    %c0_i32_1 = arith.constant 0 : i32
    return %arg0, %c0_i32, %c0_i32_0 : i32, i32, i32
  }
  func.func @transform_2(%arg0: i32, %arg1: i32) -> (i32, i32) {
    %c0_i32 = arith.constant 0 : i32
    %c0_i32_0 = arith.constant 0 : i32
    %c0_i32_1 = arith.constant 0 : i32
    return %c0_i32, %c0_i32_0 : i32, i32
  }
  func.func @transform_3(%arg0: i32, %arg1: i32) -> (i32, i32) {
    %c0_i32 = arith.constant 0 : i32
    %c0_i32_0 = arith.constant 0 : i32
    %c0_i32_1 = arith.constant 0 : i32
    return %c0_i32, %c0_i32_0 : i32, i32
  }
  func.func @transform_4(%arg0: i32, %arg1: i32) -> (i32, i32) {
    %c0_i32 = arith.constant 0 : i32
    %c0_i32_0 = arith.constant 0 : i32
    %c0_i32_1 = arith.constant 0 : i32
    return %c0_i32, %c0_i32_0 : i32, i32
  }
  func.func @transform_5(%arg0: i32, %arg1: i32) -> (i32, i32) {
    %c0_i32 = arith.constant 0 : i32
    %c0_i32_0 = arith.constant 0 : i32
    %c0_i32_1 = arith.constant 0 : i32
    return %c0_i32, %c0_i32_0 : i32, i32
  }
  func.func @transform_6(%arg0: i32, %arg1: i32) -> (i32, i32) {
    %c0_i32 = arith.constant 0 : i32
    %c0_i32_0 = arith.constant 0 : i32
    %c0_i32_1 = arith.constant 0 : i32
    return %c0_i32, %c0_i32_0 : i32, i32
  }
  func.func @transform_7(%arg0: i32, %arg1: i32) -> (i32, i32) {
    %c0_i32 = arith.constant 0 : i32
    %c0_i32_0 = arith.constant 0 : i32
    %c0_i32_1 = arith.constant 0 : i32
    return %c0_i32, %c0_i32_0 : i32, i32
  }
  func.func @transform_8(%arg0: i32, %arg1: i32) -> (i32, i32) {
    %c0_i32 = arith.constant 0 : i32
    %c0_i32_0 = arith.constant 0 : i32
    %c0_i32_1 = arith.constant 0 : i32
    return %c0_i32, %c0_i32_0 : i32, i32
  }
  func.func @transform_9(%arg0: i32, %arg1: i32) -> (i32, i32) {
    %c0_i32 = arith.constant 0 : i32
    %c0_i32_0 = arith.constant 0 : i32
    %c0_i32_1 = arith.constant 0 : i32
    return %c0_i32, %c0_i32_0 : i32, i32
  }
  func.func @transform_10(%arg0: i32, %arg1: i32) -> (i32, i32) {
    %c0_i32 = arith.constant 0 : i32
    %c0_i32_0 = arith.constant 0 : i32
    %c0_i32_1 = arith.constant 0 : i32
    return %c0_i32, %c0_i32_0 : i32, i32
  }
  func.func @transform_11(%arg0: i32, %arg1: i32) -> (i32, i32) {
    %c0_i32 = arith.constant 0 : i32
    %c0_i32_0 = arith.constant 0 : i32
    %c0_i32_1 = arith.constant 0 : i32
    return %c0_i32, %c0_i32_0 : i32, i32
  }
  func.func @transform_12(%arg0: i32, %arg1: i32) -> (i32, i32) {
    %c0_i32 = arith.constant 0 : i32
    %c0_i32_0 = arith.constant 0 : i32
    %c0_i32_1 = arith.constant 0 : i32
    return %c0_i32, %c0_i32_0 : i32, i32
  }
  func.func @transform_13(%arg0: i32, %arg1: i32) -> (i32, i32) {
    %c0_i32 = arith.constant 0 : i32
    %c0_i32_0 = arith.constant 0 : i32
    %c0_i32_1 = arith.constant 0 : i32
    return %c0_i32, %c0_i32_0 : i32, i32
  }
  func.func @transform_14(%arg0: i32, %arg1: i32) -> (i32, i32) {
    %c0_i32 = arith.constant 0 : i32
    %c0_i32_0 = arith.constant 0 : i32
    %c0_i32_1 = arith.constant 0 : i32
    return %c0_i32, %c0_i32_0 : i32, i32
  }
  func.func @transform_15(%arg0: i32, %arg1: i32) -> (i32, i32) {
    %c0_i32 = arith.constant 0 : i32
    %c0_i32_0 = arith.constant 0 : i32
    %c0_i32_1 = arith.constant 0 : i32
    return %c0_i32, %c0_i32_0 : i32, i32
  }
  func.func @transform_16(%arg0: i32, %arg1: i32) -> (i32, i32, i32) {
    %c0_i32 = arith.constant 0 : i32
    %c0_i32_0 = arith.constant 0 : i32
    return %arg0, %arg1, %c0_i32 : i32, i32, i32
  }
}

</mosaic_0001>

<llo_original>
// kernel: tpu_custom_call.1
$region0: #{tpu_custom_call.1}
  #allocation0 [shape = 'u32[]', space=smem, size = 0x4, offset = 0x4, fixed_abs, tag = 'smem constant byte address 0x4 - core index']
  #allocation1 [shape = 'u32[144,128]{1,0:T(1,128)}', space=vmem, size = 0x12000, scoped, tag = 'internal scratch']
  #allocation2 [shape = 'bf16[4,8,8]{2,1,0:T(8,128)(2,1)}', space=vmem, size = 0x2000, scoped, tag = 'scratch operand']
  #allocation3 [shape = 'bf16[4,8,8]{2,1,0:T(8,128)(2,1)}', space=vmem, size = 0x2000, scoped, tag = 'scratch operand']
  %s0 = inlined_call_operand.vmem [shape: bf16[2,8,32], index: 0, kind: input, shape index: {}]
  %s1 = inlined_call_operand.vmem [shape: bf16[2,8,32], index: 1, kind: input, shape index: {}]
  %s2 = inlined_call_operand.vmem [shape: f32[1,32], index: 2, kind: input, shape index: {}]
  %s3 = inlined_call_operand.vmem [shape: f32[1,32], index: 3, kind: input, shape index: {}]
  %s4 = inlined_call_operand.vmem [shape: bf16[32,32], index: 4, kind: input, shape index: {}]
  %s5 = inlined_call_operand.vmem [shape: f32[1,32], index: 5, kind: input, shape index: {}]
  %s6 = inlined_call_operand.vmem [shape: bf16[32,64], index: 6, kind: input, shape index: {}]
  %s7 = inlined_call_operand.vmem [shape: f32[1,64], index: 7, kind: input, shape index: {}]
  %s8 = inlined_call_operand.vmem [shape: bf16[32,32], index: 8, kind: input, shape index: {}]
  %s9 = inlined_call_operand.vmem [shape: f32[1,32], index: 9, kind: input, shape index: {}]
  %s10 = inlined_call_operand.vmem [shape: f32[1,32], index: 10, kind: input, shape index: {}]
  %s11 = inlined_call_operand.vmem [shape: f32[1,32], index: 11, kind: input, shape index: {}]
  %s12 = inlined_call_operand.vmem [shape: bf16[32,128], index: 12, kind: input, shape index: {}]
  %s13 = inlined_call_operand.vmem [shape: f32[1,128], index: 13, kind: input, shape index: {}]
  %s14 = inlined_call_operand.vmem [shape: bf16[128,32], index: 14, kind: input, shape index: {}]
  %s15 = inlined_call_operand.vmem [shape: f32[1,32], index: 15, kind: input, shape index: {}]
  %s16 = inlined_call_operand.hbm [shape: f32[2,8,32], index: 16, kind: output, shape index: {}]
  %s17 = sld [smem:[#allocation0]]
  $region101: #{tpu_custom_call.1} parent=0
    _
  %s19 = ssub.s32 1, %s17
  %s20 = scalar_select 0, %s19, %s17
  $region1: #{tpu_custom_call.1} parent=0
    #allocation4 [shape = 'u8[8192]{0}', space=vmem, size = 0x2000, scoped, tag = 'output window, operand 0']
    #allocation5 [shape = 's32[2]{0}', space=sflag, size = 0x8, scoped, tag = 'scoped memory for tpu_custom_call.1']
    %21 = vsyncpa [#allocation5], 0
    %s22 = scalar_lea.sflag [#allocation5], 1
    %23 = vsyncpa %s22, 0
    loop: start=0, step=1, limit=4
    $region2: #{tpu_custom_call.1} parent=1 // loop_pre_header
      _
    $region3: #{tpu_custom_call.1} parent=1 // loop_header
      %s25 = sphi 0, %s29
      %p26 = scmp.ge.s32.totalorder %s25, 4
      %s32 = sphi 0, %s44
      %s33 = sphi 0, %s40
      %s34 = sphi 0, %s32
      %s35 = sphi 0, %s33
      %s36 = sphi 0, %s34
      %s37 = sphi 0, %s35
      %s49 = sphi 0, %s51
      %s52 = sphi 0, %s49
      %s53 = sphi 0, %s52
      %s69 = sphi 0, %s53
      %s75 = sphi 0, %s77
      %s78 = sphi 0, %s75
      %s79 = sphi 0, %s78
      %s95 = sphi 0, %s79
      %s99 = sphi 0, %s99
      %s101 = sphi 0, %s99
      %s102 = sphi 0, %s101
      %s116 = sphi 0, %s102
      %s120 = sphi 0, %s120
      %s122 = sphi 0, %s120
      %s123 = sphi 0, %s122
      %s137 = sphi 0, %s123
      %s141 = sphi 0, %s141
      %s143 = sphi 0, %s141
      %s144 = sphi 0, %s143
      %s158 = sphi 0, %s144
      %s162 = sphi 0, %s162
      %s164 = sphi 0, %s162
      %s165 = sphi 0, %s164
      %s179 = sphi 0, %s165
      %s183 = sphi 0, %s183
      %s185 = sphi 0, %s183
      %s186 = sphi 0, %s185
      %s200 = sphi 0, %s186
      %s204 = sphi 0, %s204
      %s206 = sphi 0, %s204
      %s207 = sphi 0, %s206
      %s221 = sphi 0, %s207
      %s225 = sphi 0, %s225
      %s227 = sphi 0, %s225
      %s228 = sphi 0, %s227
      %s242 = sphi 0, %s228
      %s246 = sphi 0, %s246
      %s248 = sphi 0, %s246
      %s249 = sphi 0, %s248
      %s263 = sphi 0, %s249
      %s267 = sphi 0, %s267
      %s269 = sphi 0, %s267
      %s270 = sphi 0, %s269
      %s284 = sphi 0, %s270
      %s288 = sphi 0, %s288
      %s290 = sphi 0, %s288
      %s291 = sphi 0, %s290
      %s305 = sphi 0, %s291
      %s309 = sphi 0, %s309
      %s311 = sphi 0, %s309
      %s312 = sphi 0, %s311
      %s326 = sphi 0, %s312
      %s330 = sphi 0, %s330
      %s332 = sphi 0, %s330
      %s333 = sphi 0, %s332
      %s347 = sphi 0, %s333
      %s351 = sphi 0, %s351
      %s353 = sphi 0, %s351
      %s354 = sphi 0, %s353
      %s368 = sphi 0, %s354
      %s372 = sphi 0, %s372
      %s374 = sphi 0, %s372
      %s375 = sphi 0, %s374
      %s389 = sphi 0, %s375
      %s397 = sphi 0, %s399
      %s400 = sphi 0, %s397
      %s401 = sphi 0, %s400
      %s417 = sphi 0, %s401
    $region4: #{tpu_custom_call.1} parent=1 // loop_header_branch
      %28 = sbr.rel (%p26) target = $region8
    $region5: #{tpu_custom_call.1} parent=1 // loop_body
      %s30 = ssub.s32 %s25, 1
      %s31 = ssub.s32 %s25, 2
      %s38 = sadd.s32 1, %s33
      %p39 = scmp.ge.s32.totalorder %s38, 1
      %s40 = scalar_select %p39, 0, %s38
      %s41 = sadd.s32 1, %s32
      %s42 = scalar_select %p39, %s41, %s32
      %p43 = scmp.ge.s32.totalorder %s42, 2
      %s44 = scalar_select %p43, 0, %s42
      %s45 = ssub.s32 %s32, %s44
      %s46 = ssub.s32 %s33, %s40
      %s47 = sor.u32 %s45, %s46
      %p48 = scmp.eq.s32.totalorder %s47, 0
      %s50 = sadd.s32 %s49, 1
      %s51 = scalar_select %p48, %s49, %s50
      %p54 = pneg %p48
      %p55 = scmp.eq.s32.totalorder %s25, 1
      %p56 = por %p54, %p55
      %p57 = scmp.ne.s32.totalorder %s49, %s52
      %p58 = scmp.eq.s32.totalorder %s25, 0
      %p59 = por %p57, %p58
      %p60 = scmp.ne.s32.totalorder %s49, %s52
      %p61 = scmp.eq.s32.totalorder %s30, 1
      %p62 = por %p60, %p61
      %p63 = scmp.ne.s32.totalorder %s52, %s53
      %p64 = scmp.eq.s32.totalorder %s30, 0
      %p65 = por %p63, %p64
      %p66 = scmp.ne.s32.totalorder %s52, %s53
      %p67 = scmp.eq.s32.totalorder %s31, 1
      %p68 = por %p66, %p67
      %p70 = scmp.ne.s32.totalorder %s53, %s69
      %p71 = scmp.eq.s32.totalorder %s31, 0
      %p72 = por %p70, %p71
      %s73 = ssub.s32 %s32, %s44
      %p74 = scmp.eq.s32.totalorder %s73, 0
      %s76 = sadd.s32 %s75, 1
      %s77 = scalar_select %p74, %s75, %s76
      %p80 = pneg %p74
      %p81 = scmp.eq.s32.totalorder %s25, 1
      %p82 = por %p80, %p81
      %p83 = scmp.ne.s32.totalorder %s75, %s78
      %p84 = scmp.eq.s32.totalorder %s25, 0
      %p85 = por %p83, %p84
      %p86 = scmp.ne.s32.totalorder %s75, %s78
      %p87 = scmp.eq.s32.totalorder %s30, 1
      %p88 = por %p86, %p87
      %p89 = scmp.ne.s32.totalorder %s78, %s79
      %p90 = scmp.eq.s32.totalorder %s30, 0
      %p91 = por %p89, %p90
      %p92 = scmp.ne.s32.totalorder %s78, %s79
      %p93 = scmp.eq.s32.totalorder %s31, 1
      %p94 = por %p92, %p93
      %p96 = scmp.ne.s32.totalorder %s79, %s95
      %p97 = scmp.eq.s32.totalorder %s31, 0
      %p98 = por %p96, %p97
      %s100 = sadd.s32 %s99, 1
      %p103 = scmp.eq.s32.totalorder %s25, 1
      %p104 = scmp.ne.s32.totalorder %s99, %s101
      %p105 = scmp.eq.s32.totalorder %s25, 0
      %p106 = por %p104, %p105
      %p107 = scmp.ne.s32.totalorder %s99, %s101
      %p108 = scmp.eq.s32.totalorder %s30, 1
      %p109 = por %p107, %p108
      %p110 = scmp.ne.s32.totalorder %s101, %s102
      %p111 = scmp.eq.s32.totalorder %s30, 0
      %p112 = por %p110, %p111
      %p113 = scmp.ne.s32.totalorder %s101, %s102
      %p114 = scmp.eq.s32.totalorder %s31, 1
      %p115 = por %p113, %p114
      %p117 = scmp.ne.s32.totalorder %s102, %s116
      %p118 = scmp.eq.s32.totalorder %s31, 0
      %p119 = por %p117, %p118
      %s121 = sadd.s32 %s120, 1
      %p124 = scmp.eq.s32.totalorder %s25, 1
      %p125 = scmp.ne.s32.totalorder %s120, %s122
      %p126 = scmp.eq.s32.totalorder %s25, 0
      %p127 = por %p125, %p126
      %p128 = scmp.ne.s32.totalorder %s120, %s122
      %p129 = scmp.eq.s32.totalorder %s30, 1
      %p130 = por %p128, %p129
      %p131 = scmp.ne.s32.totalorder %s122, %s123
      %p132 = scmp.eq.s32.totalorder %s30, 0
      %p133 = por %p131, %p132
      %p134 = scmp.ne.s32.totalorder %s122, %s123
      %p135 = scmp.eq.s32.totalorder %s31, 1
      %p136 = por %p134, %p135
      %p138 = scmp.ne.s32.totalorder %s123, %s137
      %p139 = scmp.eq.s32.totalorder %s31, 0
      %p140 = por %p138, %p139
      %s142 = sadd.s32 %s141, 1
      %p145 = scmp.eq.s32.totalorder %s25, 1
      %p146 = scmp.ne.s32.totalorder %s141, %s143
      %p147 = scmp.eq.s32.totalorder %s25, 0
      %p148 = por %p146, %p147
      %p149 = scmp.ne.s32.totalorder %s141, %s143
      %p150 = scmp.eq.s32.totalorder %s30, 1
      %p151 = por %p149, %p150
      %p152 = scmp.ne.s32.totalorder %s143, %s144
      %p153 = scmp.eq.s32.totalorder %s30, 0
      %p154 = por %p152, %p153
      %p155 = scmp.ne.s32.totalorder %s143, %s144
      %p156 = scmp.eq.s32.totalorder %s31, 1
      %p157 = por %p155, %p156
      %p159 = scmp.ne.s32.totalorder %s144, %s158
      %p160 = scmp.eq.s32.totalorder %s31, 0
      %p161 = por %p159, %p160
      %s163 = sadd.s32 %s162, 1
      %p166 = scmp.eq.s32.totalorder %s25, 1
      %p167 = scmp.ne.s32.totalorder %s162, %s164
      %p168 = scmp.eq.s32.totalorder %s25, 0
      %p169 = por %p167, %p168
      %p170 = scmp.ne.s32.totalorder %s162, %s164
      %p171 = scmp.eq.s32.totalorder %s30, 1
      %p172 = por %p170, %p171
      %p173 = scmp.ne.s32.totalorder %s164, %s165
      %p174 = scmp.eq.s32.totalorder %s30, 0
      %p175 = por %p173, %p174
      %p176 = scmp.ne.s32.totalorder %s164, %s165
      %p177 = scmp.eq.s32.totalorder %s31, 1
      %p178 = por %p176, %p177
      %p180 = scmp.ne.s32.totalorder %s165, %s179
      %p181 = scmp.eq.s32.totalorder %s31, 0
      %p182 = por %p180, %p181
      %s184 = sadd.s32 %s183, 1
      %p187 = scmp.eq.s32.totalorder %s25, 1
      %p188 = scmp.ne.s32.totalorder %s183, %s185
      %p189 = scmp.eq.s32.totalorder %s25, 0
      %p190 = por %p188, %p189
      %p191 = scmp.ne.s32.totalorder %s183, %s185
      %p192 = scmp.eq.s32.totalorder %s30, 1
      %p193 = por %p191, %p192
      %p194 = scmp.ne.s32.totalorder %s185, %s186
      %p195 = scmp.eq.s32.totalorder %s30, 0
      %p196 = por %p194, %p195
      %p197 = scmp.ne.s32.totalorder %s185, %s186
      %p198 = scmp.eq.s32.totalorder %s31, 1
      %p199 = por %p197, %p198
      %p201 = scmp.ne.s32.totalorder %s186, %s200
      %p202 = scmp.eq.s32.totalorder %s31, 0
      %p203 = por %p201, %p202
      %s205 = sadd.s32 %s204, 1
      %p208 = scmp.eq.s32.totalorder %s25, 1
      %p209 = scmp.ne.s32.totalorder %s204, %s206
      %p210 = scmp.eq.s32.totalorder %s25, 0
      %p211 = por %p209, %p210
      %p212 = scmp.ne.s32.totalorder %s204, %s206
      %p213 = scmp.eq.s32.totalorder %s30, 1
      %p214 = por %p212, %p213
      %p215 = scmp.ne.s32.totalorder %s206, %s207
      %p216 = scmp.eq.s32.totalorder %s30, 0
      %p217 = por %p215, %p216
      %p218 = scmp.ne.s32.totalorder %s206, %s207
      %p219 = scmp.eq.s32.totalorder %s31, 1
      %p220 = por %p218, %p219
      %p222 = scmp.ne.s32.totalorder %s207, %s221
      %p223 = scmp.eq.s32.totalorder %s31, 0
      %p224 = por %p222, %p223
      %s226 = sadd.s32 %s225, 1
      %p229 = scmp.eq.s32.totalorder %s25, 1
      %p230 = scmp.ne.s32.totalorder %s225, %s227
      %p231 = scmp.eq.s32.totalorder %s25, 0
      %p232 = por %p230, %p231
      %p233 = scmp.ne.s32.totalorder %s225, %s227
      %p234 = scmp.eq.s32.totalorder %s30, 1
      %p235 = por %p233, %p234
      %p236 = scmp.ne.s32.totalorder %s227, %s228
      %p237 = scmp.eq.s32.totalorder %s30, 0
      %p238 = por %p236, %p237
      %p239 = scmp.ne.s32.totalorder %s227, %s228
      %p240 = scmp.eq.s32.totalorder %s31, 1
      %p241 = por %p239, %p240
      %p243 = scmp.ne.s32.totalorder %s228, %s242
      %p244 = scmp.eq.s32.totalorder %s31, 0
      %p245 = por %p243, %p244
      %s247 = sadd.s32 %s246, 1
      %p250 = scmp.eq.s32.totalorder %s25, 1
      %p251 = scmp.ne.s32.totalorder %s246, %s248
      %p252 = scmp.eq.s32.totalorder %s25, 0
      %p253 = por %p251, %p252
      %p254 = scmp.ne.s32.totalorder %s246, %s248
      %p255 = scmp.eq.s32.totalorder %s30, 1
      %p256 = por %p254, %p255
      %p257 = scmp.ne.s32.totalorder %s248, %s249
      %p258 = scmp.eq.s32.totalorder %s30, 0
      %p259 = por %p257, %p258
      %p260 = scmp.ne.s32.totalorder %s248, %s249
      %p261 = scmp.eq.s32.totalorder %s31, 1
      %p262 = por %p260, %p261
      %p264 = scmp.ne.s32.totalorder %s249, %s263
      %p265 = scmp.eq.s32.totalorder %s31, 0
      %p266 = por %p264, %p265
      %s268 = sadd.s32 %s267, 1
      %p271 = scmp.eq.s32.totalorder %s25, 1
      %p272 = scmp.ne.s32.totalorder %s267, %s269
      %p273 = scmp.eq.s32.totalorder %s25, 0
      %p274 = por %p272, %p273
      %p275 = scmp.ne.s32.totalorder %s267, %s269
      %p276 = scmp.eq.s32.totalorder %s30, 1
      %p277 = por %p275, %p276
      %p278 = scmp.ne.s32.totalorder %s269, %s270
      %p279 = scmp.eq.s32.totalorder %s30, 0
      %p280 = por %p278, %p279
      %p281 = scmp.ne.s32.totalorder %s269, %s270
      %p282 = scmp.eq.s32.totalorder %s31, 1
      %p283 = por %p281, %p282
      %p285 = scmp.ne.s32.totalorder %s270, %s284
      %p286 = scmp.eq.s32.totalorder %s31, 0
      %p287 = por %p285, %p286
      %s289 = sadd.s32 %s288, 1
      %p292 = scmp.eq.s32.totalorder %s25, 1
      %p293 = scmp.ne.s32.totalorder %s288, %s290
      %p294 = scmp.eq.s32.totalorder %s25, 0
      %p295 = por %p293, %p294
      %p296 = scmp.ne.s32.totalorder %s288, %s290
      %p297 = scmp.eq.s32.totalorder %s30, 1
      %p298 = por %p296, %p297
      %p299 = scmp.ne.s32.totalorder %s290, %s291
      %p300 = scmp.eq.s32.totalorder %s30, 0
      %p301 = por %p299, %p300
      %p302 = scmp.ne.s32.totalorder %s290, %s291
      %p303 = scmp.eq.s32.totalorder %s31, 1
      %p304 = por %p302, %p303
      %p306 = scmp.ne.s32.totalorder %s291, %s305
      %p307 = scmp.eq.s32.totalorder %s31, 0
      %p308 = por %p306, %p307
      %s310 = sadd.s32 %s309, 1
      %p313 = scmp.eq.s32.totalorder %s25, 1
      %p314 = scmp.ne.s32.totalorder %s309, %s311
      %p315 = scmp.eq.s32.totalorder %s25, 0
      %p316 = por %p314, %p315
      %p317 = scmp.ne.s32.totalorder %s309, %s311
      %p318 = scmp.eq.s32.totalorder %s30, 1
      %p319 = por %p317, %p318
      %p320 = scmp.ne.s32.totalorder %s311, %s312
      %p321 = scmp.eq.s32.totalorder %s30, 0
      %p322 = por %p320, %p321
      %p323 = scmp.ne.s32.totalorder %s311, %s312
      %p324 = scmp.eq.s32.totalorder %s31, 1
      %p325 = por %p323, %p324
      %p327 = scmp.ne.s32.totalorder %s312, %s326
      %p328 = scmp.eq.s32.totalorder %s31, 0
      %p329 = por %p327, %p328
      %s331 = sadd.s32 %s330, 1
      %p334 = scmp.eq.s32.totalorder %s25, 1
      %p335 = scmp.ne.s32.totalorder %s330, %s332
      %p336 = scmp.eq.s32.totalorder %s25, 0
      %p337 = por %p335, %p336
      %p338 = scmp.ne.s32.totalorder %s330, %s332
      %p339 = scmp.eq.s32.totalorder %s30, 1
      %p340 = por %p338, %p339
      %p341 = scmp.ne.s32.totalorder %s332, %s333
      %p342 = scmp.eq.s32.totalorder %s30, 0
      %p343 = por %p341, %p342
      %p344 = scmp.ne.s32.totalorder %s332, %s333
      %p345 = scmp.eq.s32.totalorder %s31, 1
      %p346 = por %p344, %p345
      %p348 = scmp.ne.s32.totalorder %s333, %s347
      %p349 = scmp.eq.s32.totalorder %s31, 0
      %p350 = por %p348, %p349
      %s352 = sadd.s32 %s351, 1
      %p355 = scmp.eq.s32.totalorder %s25, 1
      %p356 = scmp.ne.s32.totalorder %s351, %s353
      %p357 = scmp.eq.s32.totalorder %s25, 0
      %p358 = por %p356, %p357
      %p359 = scmp.ne.s32.totalorder %s351, %s353
      %p360 = scmp.eq.s32.totalorder %s30, 1
      %p361 = por %p359, %p360
      %p362 = scmp.ne.s32.totalorder %s353, %s354
      %p363 = scmp.eq.s32.totalorder %s30, 0
      %p364 = por %p362, %p363
      %p365 = scmp.ne.s32.totalorder %s353, %s354
      %p366 = scmp.eq.s32.totalorder %s31, 1
      %p367 = por %p365, %p366
      %p369 = scmp.ne.s32.totalorder %s354, %s368
      %p370 = scmp.eq.s32.totalorder %s31, 0
      %p371 = por %p369, %p370
      %s373 = sadd.s32 %s372, 1
      %p376 = scmp.eq.s32.totalorder %s25, 1
      %p377 = scmp.ne.s32.totalorder %s372, %s374
      %p378 = scmp.eq.s32.totalorder %s25, 0
      %p379 = por %p377, %p378
      %p380 = scmp.ne.s32.totalorder %s372, %s374
      %p381 = scmp.eq.s32.totalorder %s30, 1
      %p382 = por %p380, %p381
      %p383 = scmp.ne.s32.totalorder %s374, %s375
      %p384 = scmp.eq.s32.totalorder %s30, 0
      %p385 = por %p383, %p384
      %p386 = scmp.ne.s32.totalorder %s374, %s375
      %p387 = scmp.eq.s32.totalorder %s31, 1
      %p388 = por %p386, %p387
      %p390 = scmp.ne.s32.totalorder %s375, %s389
      %p391 = scmp.eq.s32.totalorder %s31, 0
      %p392 = por %p390, %p391
      %s393 = ssub.s32 %s32, %s44
      %s394 = ssub.s32 %s33, %s40
      %s395 = sor.u32 %s393, %s394
      %p396 = scmp.eq.s32.totalorder %s395, 0
      %s398 = sadd.s32 %s397, 1
      %s399 = scalar_select %p396, %s397, %s398
      %p402 = pneg %p396
      %p403 = scmp.eq.s32.totalorder %s25, 1
      %p404 = por %p402, %p403
      %p405 = scmp.ne.s32.totalorder %s397, %s400
      %p406 = scmp.eq.s32.totalorder %s25, 0
      %p407 = por %p405, %p406
      %p408 = scmp.ne.s32.totalorder %s397, %s400
      %p409 = scmp.eq.s32.totalorder %s30, 1
      %p410 = por %p408, %p409
      %p411 = scmp.ne.s32.totalorder %s400, %s401
      %p412 = scmp.eq.s32.totalorder %s30, 0
      %p413 = por %p411, %p412
      %p414 = scmp.ne.s32.totalorder %s400, %s401
      %p415 = scmp.eq.s32.totalorder %s31, 1
      %p416 = por %p414, %p415
      %p418 = scmp.ne.s32.totalorder %s401, %s417
      %p419 = scmp.eq.s32.totalorder %s31, 0
      %p420 = por %p418, %p419
      %p421 = scmp.le.s32.totalorder 1, %s25
      %p422 = scmp.lt.s32.totalorder %s25, 3
      %p423 = pnand %p421, %p422
      %p424 = pneg %p423
      // Predicated region
      $region9: #{tpu_custom_call.1} parent=5 // pred_check
        _
      $region10: #{tpu_custom_call.1} parent=5 // pred_check_branch
        %426 = sbr.rel (%p423) target = $region12
      $region11: #{tpu_custom_call.1} parent=5 // pred_region
        %s427 = ssub.s32 %s25, 1
        // Predicated region
        $region13: #{tpu_custom_call.1} parent=11 // pred_check
          %p428 = pneg %p112
        $region14: #{tpu_custom_call.1} parent=11 // pred_check_branch
          %430 = sbr.rel (%p428) target = $region16
        $region15: #{tpu_custom_call.1} parent=11 // pred_region
          _
        $region16: #{tpu_custom_call.1} parent=11 // pred_fallthru
          _
        // Predicated region
        $region17: #{tpu_custom_call.1} parent=11 // pred_check
          %p431 = pneg %p133
        $region18: #{tpu_custom_call.1} parent=11 // pred_check_branch
          %433 = sbr.rel (%p431) target = $region20
        $region19: #{tpu_custom_call.1} parent=11 // pred_region
          _
        $region20: #{tpu_custom_call.1} parent=11 // pred_fallthru
          _
        // Predicated region
        $region21: #{tpu_custom_call.1} parent=11 // pred_check
          %p434 = pneg %p154
        $region22: #{tpu_custom_call.1} parent=11 // pred_check_branch
          %436 = sbr.rel (%p434) target = $region24
        $region23: #{tpu_custom_call.1} parent=11 // pred_region
          _
        $region24: #{tpu_custom_call.1} parent=11 // pred_fallthru
          _
        // Predicated region
        $region25: #{tpu_custom_call.1} parent=11 // pred_check
          %p437 = pneg %p175
        $region26: #{tpu_custom_call.1} parent=11 // pred_check_branch
          %439 = sbr.rel (%p437) target = $region28
        $region27: #{tpu_custom_call.1} parent=11 // pred_region
          _
        $region28: #{tpu_custom_call.1} parent=11 // pred_fallthru
          _
        // Predicated region
        $region29: #{tpu_custom_call.1} parent=11 // pred_check
          %p440 = pneg %p196
        $region30: #{tpu_custom_call.1} parent=11 // pred_check_branch
          %442 = sbr.rel (%p440) target = $region32
        $region31: #{tpu_custom_call.1} parent=11 // pred_region
          _
        $region32: #{tpu_custom_call.1} parent=11 // pred_fallthru
          _
        // Predicated region
        $region33: #{tpu_custom_call.1} parent=11 // pred_check
          %p443 = pneg %p217
        $region34: #{tpu_custom_call.1} parent=11 // pred_check_branch
          %445 = sbr.rel (%p443) target = $region36
        $region35: #{tpu_custom_call.1} parent=11 // pred_region
          _
        $region36: #{tpu_custom_call.1} parent=11 // pred_fallthru
          _
        // Predicated region
        $region37: #{tpu_custom_call.1} parent=11 // pred_check
          %p446 = pneg %p238
        $region38: #{tpu_custom_call.1} parent=11 // pred_check_branch
          %448 = sbr.rel (%p446) target = $region40
        $region39: #{tpu_custom_call.1} parent=11 // pred_region
          _
        $region40: #{tpu_custom_call.1} parent=11 // pred_fallthru
          _
        // Predicated region
        $region41: #{tpu_custom_call.1} parent=11 // pred_check
          %p449 = pneg %p259
        $region42: #{tpu_custom_call.1} parent=11 // pred_check_branch
          %451 = sbr.rel (%p449) target = $region44
        $region43: #{tpu_custom_call.1} parent=11 // pred_region
          _
        $region44: #{tpu_custom_call.1} parent=11 // pred_fallthru
          _
        // Predicated region
        $region45: #{tpu_custom_call.1} parent=11 // pred_check
          %p452 = pneg %p280
        $region46: #{tpu_custom_call.1} parent=11 // pred_check_branch
          %454 = sbr.rel (%p452) target = $region48
        $region47: #{tpu_custom_call.1} parent=11 // pred_region
          _
        $region48: #{tpu_custom_call.1} parent=11 // pred_fallthru
          _
        // Predicated region
        $region49: #{tpu_custom_call.1} parent=11 // pred_check
          %p455 = pneg %p301
        $region50: #{tpu_custom_call.1} parent=11 // pred_check_branch
          %457 = sbr.rel (%p455) target = $region52
        $region51: #{tpu_custom_call.1} parent=11 // pred_region
          _
        $region52: #{tpu_custom_call.1} parent=11 // pred_fallthru
          _
        // Predicated region
        $region53: #{tpu_custom_call.1} parent=11 // pred_check
          %p458 = pneg %p322
        $region54: #{tpu_custom_call.1} parent=11 // pred_check_branch
          %460 = sbr.rel (%p458) target = $region56
        $region55: #{tpu_custom_call.1} parent=11 // pred_region
          _
        $region56: #{tpu_custom_call.1} parent=11 // pred_fallthru
          _
        // Predicated region
        $region57: #{tpu_custom_call.1} parent=11 // pred_check
          %p461 = pneg %p343
        $region58: #{tpu_custom_call.1} parent=11 // pred_check_branch
          %463 = sbr.rel (%p461) target = $region60
        $region59: #{tpu_custom_call.1} parent=11 // pred_region
          _
        $region60: #{tpu_custom_call.1} parent=11 // pred_fallthru
          _
        // Predicated region
        $region61: #{tpu_custom_call.1} parent=11 // pred_check
          %p464 = pneg %p364
        $region62: #{tpu_custom_call.1} parent=11 // pred_check_branch
          %466 = sbr.rel (%p464) target = $region64
        $region63: #{tpu_custom_call.1} parent=11 // pred_region
          _
        $region64: #{tpu_custom_call.1} parent=11 // pred_fallthru
          _
        // Predicated region
        $region65: #{tpu_custom_call.1} parent=11 // pred_check
          %p467 = pneg %p385
        $region66: #{tpu_custom_call.1} parent=11 // pred_check_branch
          %469 = sbr.rel (%p467) target = $region68
        $region67: #{tpu_custom_call.1} parent=11 // pred_region
          _
        $region68: #{tpu_custom_call.1} parent=11 // pred_fallthru
          _
      $region12: #{tpu_custom_call.1} parent=5 // pred_fallthru
        _
      %p470 = scmp.lt.s32.totalorder %s25, 2
      // Predicated region
      $region69: #{tpu_custom_call.1} parent=5 // pred_check
        %p471 = pneg %p470
      $region70: #{tpu_custom_call.1} parent=5 // pred_check_branch
        %473 = sbr.rel (%p471) target = $region72
      $region71: #{tpu_custom_call.1} parent=5 // pred_region
        // Predicated region
        $region73: #{tpu_custom_call.1} parent=71 // pred_check
          %p474 = pneg %p59
        $region74: #{tpu_custom_call.1} parent=71 // pred_check_branch
          %476 = sbr.rel (%p474) target = $region76
        $region75: #{tpu_custom_call.1} parent=71 // pred_region
          %p477 = scmp.lt.s32.totalorder %s32, 1
          %s478 = scalar_select %p477, %s32, 1
          %p479 = scmp.lt.s32.totalorder %s33, 0
          %s480 = scalar_select %p479, %s33, 0
          %s481 = sadd.s32 %s480, %s478
          %s482 = smul.addr %s481, 4
          %s483 = scalar_lea.vmem %s0, %s482
        $region76: #{tpu_custom_call.1} parent=71 // pred_fallthru
          _
        // Predicated region
        $region77: #{tpu_custom_call.1} parent=71 // pred_check
          %p484 = pneg %p85
        $region78: #{tpu_custom_call.1} parent=71 // pred_check_branch
          %486 = sbr.rel (%p484) target = $region80
        $region79: #{tpu_custom_call.1} parent=71 // pred_region
          %p487 = scmp.lt.s32.totalorder %s32, 1
          %s488 = scalar_select %p487, %s32, 1
          %s489 = smul.addr %s488, 4
          %s490 = scalar_lea.vmem %s1, %s489
        $region80: #{tpu_custom_call.1} parent=71 // pred_fallthru
          _
      $region72: #{tpu_custom_call.1} parent=5 // pred_fallthru
        _
      %p491 = scmp.le.s32.totalorder 1, %s25
      %p492 = scmp.lt.s32.totalorder %s25, 3
      %p493 = pnand %p491, %p492
      %p494 = pneg %p493
      // Predicated region
      $region81: #{tpu_custom_call.1} parent=5 // pred_check
        _
      $region82: #{tpu_custom_call.1} parent=5 // pred_check_branch
        %496 = sbr.rel (%p493) target = $region84
      $region83: #{tpu_custom_call.1} parent=5 // pred_region
        %s497 = ssub.s32 %s25, 1
        %p498 = scmp.lt.s32.totalorder %s34, 1
        %s499 = scalar_select %p498, %s34, 1
        %p500 = scmp.lt.s32.totalorder %s35, 0
        %s501 = scalar_select %p500, %s35, 0
        %s502 = sadd.s32 %s501, %s499
        %s503 = smul.addr %s502, 4
        %s504 = scalar_lea.vmem %s0, %s503
        %p505 = pneg %p65
        %p506 = pneg %p62
        %p507 = scmp.lt.s32.totalorder %s34, 1
        %s508 = scalar_select %p507, %s34, 1
        %s509 = smul.addr %s508, 4
        %s510 = scalar_lea.vmem %s1, %s509
        %p511 = pneg %p91
        %p512 = pneg %p88
        %p513 = pneg %p112
        %p514 = pneg %p109
        %p515 = pneg %p133
        %p516 = pneg %p130
        %p517 = pneg %p154
        %p518 = pneg %p151
        %p519 = pneg %p175
        %p520 = pneg %p172
        %p521 = pneg %p196
        %p522 = pneg %p193
        %p523 = pneg %p217
        %p524 = pneg %p214
        %p525 = pneg %p238
        %p526 = pneg %p235
        %p527 = pneg %p259
        %p528 = pneg %p256
        %p529 = pneg %p280
        %p530 = pneg %p277
        %p531 = pneg %p301
        %p532 = pneg %p298
        %p533 = pneg %p322
        %p534 = pneg %p319
        %p535 = pneg %p343
        %p536 = pneg %p340
        %p537 = pneg %p364
        %p538 = pneg %p361
        %p539 = pneg %p385
        %p540 = pneg %p382
        %p541 = pneg %p413
        %p542 = pneg %p410
        %s543 = sand.u32 %s400, 1
        %s544 = scalar_lea.sflag [#allocation5], %s543
        %s545 = sand.u32 %s400, 1
        %s546 = smul.addr %s545, 8
        %s547 = scalar_lea.vmem [#allocation4], %s546
        %p548 = scmp.lt.s32.totalorder %s34, 1
        %s549 = scalar_select %p548, %s34, 1
        %p550 = scmp.lt.s32.totalorder %s35, 0
        %s551 = scalar_select %p550, %s35, 0
        %s552 = sadd.s32 %s551, %s549
        %s553 = smul.addr %s552, 4
        %s554 = scalar_lea.vmem %s0, %s553
        %p555 = scmp.lt.s32.totalorder %s34, 1
        %s556 = scalar_select %p555, %s34, 1
        %s557 = smul.addr %s556, 4
        %s558 = scalar_lea.vmem %s1, %s557
        %v560 = vld [vmem:[%s2] sm:$0x1]
        %v561 = vld [vmem:[%s3] sm:$0x1]
        %p562 = scmp.eq.s32.totalorder %s35, 0
        // Predicated region
        $region85: #{tpu_custom_call.1} parent=83 // pred_check
          %p563 = pneg %p562
        $region86: #{tpu_custom_call.1} parent=83 // pred_check_branch
          %565 = sbr.rel (%p563) target = $region88
        $region87: #{tpu_custom_call.1} parent=83 // pred_region
          %v566 = vld [vmem:[%s558] sm:$0xf]
          %v567 = vunpack.c.l.bf16 %v566
          %vm568 = vcmask 261120
          %v569 = vsel %vm568, %v567, 0.0
          %570 = vadd.xlane.f32.xlu0 %v569
          %v571 = vpop.xlane.xlu0 %570
          %v572 = vrcp.pop 32.0
          %v573 = vmul.f32 %v571, %v572
          %v574 = vsub.f32 %v567, %v573
          %v575 = vmul.f32 %v574, %v574
          %v576 = vsel %vm568, %v575, 0.0
          %577 = vadd.xlane.f32.xlu0 %v576
          %v578 = vpop.xlane.xlu0 %577
          %v579 = vmul.f32 %v578, %v572
          %v580 = vadd.f32 %v579, 1e-05
          %v581 = vrsqrt.pop %v580
          %v582 = vmul.f32 %v574, %v581
          %v584 = vlaneseq
          %v585 = vshrl.u32 %v584, 7
          %v586 = vsub.s32 0, %v585
          %v587 = vrot.slane %v560, %v586
          %v589 = vmul.f32 %v582, %v587
          %v591 = vlaneseq
          %v592 = vshrl.u32 %v591, 7
          %v593 = vsub.s32 0, %v592
          %v594 = vrot.slane %v561, %v593
          %v596 = vadd.f32 %v589, %v594
          %v597 = vpack.c.bf16 %v596, %v596
          %v598 = vld [vmem:[%s6] sm:$0xf]
          %v599 = vld [vmem:[%s6 + $0x4] sm:$0xf]
          %v600 = vld [vmem:[%s6 + $0x8] sm:$0xf]
          %v601 = vld [vmem:[%s6 + $0xc] sm:$0xf]
          %v602 = vld [vmem:[%s7] sm:$0x1]
          %v604 = vlaneseq
          %v605 = vshrl.u32 %v604, 7
          %v606 = vsub.s32 0, %v605
          %v607 = vrot.slane %v602, %v606
          %v613 = vunpack.c.l.b16 %v598
          %v614 = vunpack.c.l.b16 %v599
          %v615 = vunpack.c.l.b16 %v600
          %v616 = vunpack.c.l.b16 %v601
          %v617 = vpack.c.b16 %v614, %v613
          %v618 = vpack.c.b16 %v616, %v615
          %v622 = vsel %vm568, %v597, 0
          %624 = vmatprep.subr.bf16.mxu0 0
          %625 = vmatpush1.bf16.msra.mxu0 %v617
          %626 = vmatprep.subr.bf16.mxu0 0
          %627 = vmatpush1.bf16.msra.mxu0 %v618
          %628 = vmatprep.subr.bf16.mxu0 0
          %629 = vmatpush1.bf16.msra.mxu0 0
          %630 = vmatprep.subr.bf16.mxu0 0
          %631 = vmatpush1.bf16.msra.mxu0 0
          %632 = vmatprep.subr.bf16.mxu0 0
          %633 = vmatpush1.bf16.msra.mxu0 0
          %634 = vmatprep.subr.bf16.mxu0 0
          %635 = vmatpush1.bf16.msra.mxu0 0
          %636 = vmatprep.subr.bf16.mxu0 0
          %637 = vmatpush1.bf16.msra.mxu0 0
          %638 = vmatprep.subr.bf16.mxu0 0
          %639 = vmatpush1.bf16.msra.mxu0 0
          %640 = vmatprep.subr.bf16.mxu0 0
          %641 = vmatpush1.bf16.msra.mxu0 0
          %642 = vmatprep.subr.bf16.mxu0 0
          %643 = vmatpush1.bf16.msra.mxu0 0
          %644 = vmatprep.subr.bf16.mxu0 0
          %645 = vmatpush1.bf16.msra.mxu0 0
          %646 = vmatprep.subr.bf16.mxu0 0
          %647 = vmatpush1.bf16.msra.mxu0 0
          %648 = vmatprep.subr.bf16.mxu0 0
          %649 = vmatpush1.bf16.msra.mxu0 0
          %650 = vmatprep.subr.bf16.mxu0 0
          %651 = vmatpush1.bf16.msra.mxu0 0
          %652 = vmatprep.subr.bf16.mxu0 0
          %653 = vmatpush1.bf16.msra.mxu0 0
          %654 = vmatprep.subr.bf16.mxu0 0
          %655 = vmatpush1.bf16.msra.mxu0 0
          %656 = vmatprep.mubr.bf16.mxu0 0
          %657 = vmatmul.mubr.bf16.gmra.mrb[0].mxu0 %v622
          %v658 = vpop.f32.mrb[0].mxu0
          %v659 = vadd.f32 %v607, %v658
          %v660 = vpop.f32.mrb[0].mxu0
          %v661 = vpop.f32.mrb[0].mxu0
          %v662 = vpop.f32.mrb[0].mxu0
          %663 = vdwg.mxu0
          %v664 = vpack.c.bf16 %v659, %v659
          %vm665 = vcmask 60416
          %666 = vst.msk [vmem:[#allocation2] sm:$0xf] %vm665, %v664
          %v668 = vunpack.c.l.b16 %v664
          %v669 = vpack.c.b16 %v668, %v668
          %670 = vrot.lane.b32.xlu0 %v669, 96
          %v671 = vpop.permute.xlu0 %670
          %673 = vst.msk [vmem:[#allocation3] sm:$0xf] %vm665, %v671
          %674 = vrot.lane.b32.xlu0 %v669, 120
          %v675 = vpop.permute.xlu0 %674
          %s677 = scalar_lea.vmem [#allocation2], 4
          %678 = vst.msk [vmem:[%s677] sm:$0xf] %vm665, %v675
          %679 = vrot.lane.b32.xlu0 %v669, 88
          %v680 = vpop.permute.xlu0 %679
          %s682 = scalar_lea.vmem [#allocation3], 4
          %683 = vst.msk [vmem:[%s682] sm:$0xf] %vm665, %v680
          %684 = vrot.lane.b32.xlu0 %v669, 112
          %v685 = vpop.permute.xlu0 %684
          %s687 = scalar_lea.vmem [#allocation2], 8
          %688 = vst.msk [vmem:[%s687] sm:$0xf] %vm665, %v685
          %689 = vrot.lane.b32.xlu0 %v669, 80
          %v690 = vpop.permute.xlu0 %689
          %s692 = scalar_lea.vmem [#allocation3], 8
          %693 = vst.msk [vmem:[%s692] sm:$0xf] %vm665, %v690
          %694 = vrot.lane.b32.xlu0 %v669, 104
          %v695 = vpop.permute.xlu0 %694
          %s697 = scalar_lea.vmem [#allocation2], 12
          %698 = vst.msk [vmem:[%s697] sm:$0xf] %vm665, %v695
          %699 = vrot.lane.b32.xlu0 %v669, 72
          %v700 = vpop.permute.xlu0 %699
          %s702 = scalar_lea.vmem [#allocation3], 12
          %703 = vst.msk [vmem:[%s702] sm:$0xf] %vm665, %v700
        $region88: #{tpu_custom_call.1} parent=83 // pred_fallthru
          _
        %v704 = vld [vmem:[%s554] sm:$0xf]
        %v705 = vunpack.c.l.bf16 %v704
        %vm706 = vcmask 261120
        %v707 = vsel %vm706, %v705, 0.0
        %708 = vadd.xlane.f32.xlu0 %v707
        %v709 = vpop.xlane.xlu0 %708
        %v710 = vrcp.pop 32.0
        %v711 = vmul.f32 %v709, %v710
        %v712 = vsub.f32 %v705, %v711
        %v713 = vmul.f32 %v712, %v712
        %v714 = vsel %vm706, %v713, 0.0
        %715 = vadd.xlane.f32.xlu0 %v714
        %v716 = vpop.xlane.xlu0 %715
        %v717 = vmul.f32 %v716, %v710
        %v718 = vadd.f32 %v717, 1e-05
        %v719 = vrsqrt.pop %v718
        %v720 = vmul.f32 %v712, %v719
        %v722 = vlaneseq
        %v723 = vshrl.u32 %v722, 7
        %v724 = vsub.s32 0, %v723
        %v725 = vrot.slane %v560, %v724
        %v727 = vmul.f32 %v720, %v725
        %v729 = vlaneseq
        %v730 = vshrl.u32 %v729, 7
        %v731 = vsub.s32 0, %v730
        %v732 = vrot.slane %v561, %v731
        %v734 = vadd.f32 %v727, %v732
        %v735 = vpack.c.bf16 %v734, %v734
        %v736 = vld [vmem:[%s4] sm:$0xf]
        %v737 = vld [vmem:[%s4 + $0x4] sm:$0xf]
        %v738 = vld [vmem:[%s4 + $0x8] sm:$0xf]
        %v739 = vld [vmem:[%s4 + $0xc] sm:$0xf]
        %v740 = vld [vmem:[%s5] sm:$0x1]
        %v742 = vlaneseq
        %v743 = vshrl.u32 %v742, 7
        %v744 = vsub.s32 0, %v743
        %v745 = vrot.slane %v740, %v744
        %v751 = vunpack.c.l.b16 %v736
        %v752 = vunpack.c.l.b16 %v737
        %v753 = vunpack.c.l.b16 %v738
        %v754 = vunpack.c.l.b16 %v739
        %v755 = vpack.c.b16 %v752, %v751
        %v756 = vpack.c.b16 %v754, %v753
        %v760 = vsel %vm706, %v735, 0
        %762 = vmatprep.subr.bf16.mxu0 0
        %763 = vmatpush1.bf16.msra.mxu0 %v755
        %764 = vmatprep.subr.bf16.mxu0 0
        %765 = vmatpush1.bf16.msra.mxu0 %v756
        %766 = vmatprep.subr.bf16.mxu0 0
        %767 = vmatpush1.bf16.msra.mxu0 0
        %768 = vmatprep.subr.bf16.mxu0 0
        %769 = vmatpush1.bf16.msra.mxu0 0
        %770 = vmatprep.subr.bf16.mxu0 0
        %771 = vmatpush1.bf16.msra.mxu0 0
        %772 = vmatprep.subr.bf16.mxu0 0
        %773 = vmatpush1.bf16.msra.mxu0 0
        %774 = vmatprep.subr.bf16.mxu0 0
        %775 = vmatpush1.bf16.msra.mxu0 0
        %776 = vmatprep.subr.bf16.mxu0 0
        %777 = vmatpush1.bf16.msra.mxu0 0
        %778 = vmatprep.subr.bf16.mxu0 0
        %779 = vmatpush1.bf16.msra.mxu0 0
        %780 = vmatprep.subr.bf16.mxu0 0
        %781 = vmatpush1.bf16.msra.mxu0 0
        %782 = vmatprep.subr.bf16.mxu0 0
        %783 = vmatpush1.bf16.msra.mxu0 0
        %784 = vmatprep.subr.bf16.mxu0 0
        %785 = vmatpush1.bf16.msra.mxu0 0
        %786 = vmatprep.subr.bf16.mxu0 0
        %787 = vmatpush1.bf16.msra.mxu0 0
        %788 = vmatprep.subr.bf16.mxu0 0
        %789 = vmatpush1.bf16.msra.mxu0 0
        %790 = vmatprep.subr.bf16.mxu0 0
        %791 = vmatpush1.bf16.msra.mxu0 0
        %792 = vmatprep.subr.bf16.mxu0 0
        %793 = vmatpush1.bf16.msra.mxu0 0
        %794 = vmatprep.mubr.bf16.mxu0 0
        %795 = vmatmul.mubr.bf16.gmra.mrb[0].mxu0 %v760
        %v796 = vpop.f32.mrb[0].mxu0
        %v797 = vadd.f32 %v745, %v796
        %v798 = vpop.f32.mrb[0].mxu0
        %v799 = vpop.f32.mrb[0].mxu0
        %v800 = vpop.f32.mrb[0].mxu0
        %801 = vdwg.mxu0
        %v802 = vmul.f32 %v797, 0.35355338
        %v803 = vpack.c.bf16 %v802, %v802
        %805 = vrot.lane.b32.xlu0 %v803, 120
        %v806 = vpop.permute.xlu0 %805
        %807 = vrot.lane.b32.xlu0 %v803, 112
        %v808 = vpop.permute.xlu0 %807
        %809 = vrot.lane.b32.xlu0 %v803, 104
        %v810 = vpop.permute.xlu0 %809
        %v811 = vld [vmem:[#allocation2] sm:$0xf]
        %v812 = vld [vmem:[#allocation2 + $0x4] sm:$0xf]
        %v813 = vld [vmem:[#allocation2 + $0x8] sm:$0xf]
        %v814 = vld [vmem:[#allocation2 + $0xc] sm:$0xf]
        %v815 = vld [vmem:[#allocation3] sm:$0xf]
        %v816 = vld [vmem:[#allocation3 + $0x4] sm:$0xf]
        %v817 = vld [vmem:[#allocation3 + $0x8] sm:$0xf]
        %v818 = vld [vmem:[#allocation3 + $0xc] sm:$0xf]
        %vm819 = vcmask 64512
        %v821 = vsel %vm819, %v803, 0
        %v824 = vsel %vm819, %v811, 0
        %826 = vmatprep.subr.bf16.mxu0 0
        %827 = vmatpush1.bf16.xpose.msra.mxu0 %v824
        %828 = vmatprep.subr.bf16.mxu0 0
        %829 = vmatpush1.bf16.xpose.msra.mxu0 0
        %830 = vmatprep.subr.bf16.mxu0 0
        %831 = vmatpush1.bf16.xpose.msra.mxu0 0
        %832 = vmatprep.subr.bf16.mxu0 0
        %833 = vmatpush1.bf16.xpose.msra.mxu0 0
        %834 = vmatprep.subr.bf16.mxu0 0
        %835 = vmatpush1.bf16.xpose.msra.mxu0 0
        %836 = vmatprep.subr.bf16.mxu0 0
        %837 = vmatpush1.bf16.xpose.msra.mxu0 0
        %838 = vmatprep.subr.bf16.mxu0 0
        %839 = vmatpush1.bf16.xpose.msra.mxu0 0
        %840 = vmatprep.subr.bf16.mxu0 0
        %841 = vmatpush1.bf16.xpose.msra.mxu0 0
        %842 = vmatprep.subr.bf16.mxu0 0
        %843 = vmatpush1.bf16.xpose.msra.mxu0 0
        %844 = vmatprep.subr.bf16.mxu0 0
        %845 = vmatpush1.bf16.xpose.msra.mxu0 0
        %846 = vmatprep.subr.bf16.mxu0 0
        %847 = vmatpush1.bf16.xpose.msra.mxu0 0
        %848 = vmatprep.subr.bf16.mxu0 0
        %849 = vmatpush1.bf16.xpose.msra.mxu0 0
        %850 = vmatprep.subr.bf16.mxu0 0
        %851 = vmatpush1.bf16.xpose.msra.mxu0 0
        %852 = vmatprep.subr.bf16.mxu0 0
        %853 = vmatpush1.bf16.xpose.msra.mxu0 0
        %854 = vmatprep.subr.bf16.mxu0 0
        %855 = vmatpush1.bf16.xpose.msra.mxu0 0
        %856 = vmatprep.subr.bf16.mxu0 0
        %857 = vmatpush1.bf16.xpose.msra.mxu0 0
        %858 = vmatprep.mubr.bf16.mxu0 0
        %859 = vmatmul.mubr.bf16.gmra.mrb[0].mxu0 %v821
        %v860 = vpop.f32.mrb[0].mxu0
        %v861 = vadd.f32 0.0, %v860
        %v862 = vpop.f32.mrb[0].mxu0
        %v863 = vpop.f32.mrb[0].mxu0
        %v864 = vpop.f32.mrb[0].mxu0
        %865 = vdwg.mxu0
        %v867 = vsel %vm819, %v806, 0
        %v870 = vsel %vm819, %v812, 0
        %872 = vmatprep.subr.bf16.mxu0 0
        %873 = vmatpush1.bf16.xpose.msra.mxu0 %v870
        %874 = vmatprep.subr.bf16.mxu0 0
        %875 = vmatpush1.bf16.xpose.msra.mxu0 0
        %876 = vmatprep.subr.bf16.mxu0 0
        %877 = vmatpush1.bf16.xpose.msra.mxu0 0
        %878 = vmatprep.subr.bf16.mxu0 0
        %879 = vmatpush1.bf16.xpose.msra.mxu0 0
        %880 = vmatprep.subr.bf16.mxu0 0
        %881 = vmatpush1.bf16.xpose.msra.mxu0 0
        %882 = vmatprep.subr.bf16.mxu0 0
        %883 = vmatpush1.bf16.xpose.msra.mxu0 0
        %884 = vmatprep.subr.bf16.mxu0 0
        %885 = vmatpush1.bf16.xpose.msra.mxu0 0
        %886 = vmatprep.subr.bf16.mxu0 0
        %887 = vmatpush1.bf16.xpose.msra.mxu0 0
        %888 = vmatprep.subr.bf16.mxu0 0
        %889 = vmatpush1.bf16.xpose.msra.mxu0 0
        %890 = vmatprep.subr.bf16.mxu0 0
        %891 = vmatpush1.bf16.xpose.msra.mxu0 0
        %892 = vmatprep.subr.bf16.mxu0 0
        %893 = vmatpush1.bf16.xpose.msra.mxu0 0
        %894 = vmatprep.subr.bf16.mxu0 0
        %895 = vmatpush1.bf16.xpose.msra.mxu0 0
        %896 = vmatprep.subr.bf16.mxu0 0
        %897 = vmatpush1.bf16.xpose.msra.mxu0 0
        %898 = vmatprep.subr.bf16.mxu0 0
        %899 = vmatpush1.bf16.xpose.msra.mxu0 0
        %900 = vmatprep.subr.bf16.mxu0 0
        %901 = vmatpush1.bf16.xpose.msra.mxu0 0
        %902 = vmatprep.subr.bf16.mxu0 0
        %903 = vmatpush1.bf16.xpose.msra.mxu0 0
        %904 = vmatprep.mubr.bf16.mxu0 0
        %905 = vmatmul.mubr.bf16.gmra.mrb[0].mxu0 %v867
        %v906 = vpop.f32.mrb[0].mxu0
        %v907 = vadd.f32 0.0, %v906
        %v908 = vpop.f32.mrb[0].mxu0
        %v909 = vpop.f32.mrb[0].mxu0
        %v910 = vpop.f32.mrb[0].mxu0
        %911 = vdwg.mxu0
        %v913 = vsel %vm819, %v808, 0
        %v916 = vsel %vm819, %v813, 0
        %918 = vmatprep.subr.bf16.mxu0 0
        %919 = vmatpush1.bf16.xpose.msra.mxu0 %v916
        %920 = vmatprep.subr.bf16.mxu0 0
        %921 = vmatpush1.bf16.xpose.msra.mxu0 0
        %922 = vmatprep.subr.bf16.mxu0 0
        %923 = vmatpush1.bf16.xpose.msra.mxu0 0
        %924 = vmatprep.subr.bf16.mxu0 0
        %925 = vmatpush1.bf16.xpose.msra.mxu0 0
        %926 = vmatprep.subr.bf16.mxu0 0
        %927 = vmatpush1.bf16.xpose.msra.mxu0 0
        %928 = vmatprep.subr.bf16.mxu0 0
        %929 = vmatpush1.bf16.xpose.msra.mxu0 0
        %930 = vmatprep.subr.bf16.mxu0 0
        %931 = vmatpush1.bf16.xpose.msra.mxu0 0
        %932 = vmatprep.subr.bf16.mxu0 0
        %933 = vmatpush1.bf16.xpose.msra.mxu0 0
        %934 = vmatprep.subr.bf16.mxu0 0
        %935 = vmatpush1.bf16.xpose.msra.mxu0 0
        %936 = vmatprep.subr.bf16.mxu0 0
        %937 = vmatpush1.bf16.xpose.msra.mxu0 0
        %938 = vmatprep.subr.bf16.mxu0 0
        %939 = vmatpush1.bf16.xpose.msra.mxu0 0
        %940 = vmatprep.subr.bf16.mxu0 0
        %941 = vmatpush1.bf16.xpose.msra.mxu0 0
        %942 = vmatprep.subr.bf16.mxu0 0
        %943 = vmatpush1.bf16.xpose.msra.mxu0 0
        %944 = vmatprep.subr.bf16.mxu0 0
        %945 = vmatpush1.bf16.xpose.msra.mxu0 0
        %946 = vmatprep.subr.bf16.mxu0 0
        %947 = vmatpush1.bf16.xpose.msra.mxu0 0
        %948 = vmatprep.subr.bf16.mxu0 0
        %949 = vmatpush1.bf16.xpose.msra.mxu0 0
        %950 = vmatprep.mubr.bf16.mxu0 0
        %951 = vmatmul.mubr.bf16.gmra.mrb[0].mxu0 %v913
        %v952 = vpop.f32.mrb[0].mxu0
        %v953 = vadd.f32 0.0, %v952
        %v954 = vpop.f32.mrb[0].mxu0
        %v955 = vpop.f32.mrb[0].mxu0
        %v956 = vpop.f32.mrb[0].mxu0
        %957 = vdwg.mxu0
        %v959 = vsel %vm819, %v810, 0
        %v962 = vsel %vm819, %v814, 0
        %964 = vmatprep.subr.bf16.mxu0 0
        %965 = vmatpush1.bf16.xpose.msra.mxu0 %v962
        %966 = vmatprep.subr.bf16.mxu0 0
        %967 = vmatpush1.bf16.xpose.msra.mxu0 0
        %968 = vmatprep.subr.bf16.mxu0 0
        %969 = vmatpush1.bf16.xpose.msra.mxu0 0
        %970 = vmatprep.subr.bf16.mxu0 0
        %971 = vmatpush1.bf16.xpose.msra.mxu0 0
        %972 = vmatprep.subr.bf16.mxu0 0
        %973 = vmatpush1.bf16.xpose.msra.mxu0 0
        %974 = vmatprep.subr.bf16.mxu0 0
        %975 = vmatpush1.bf16.xpose.msra.mxu0 0
        %976 = vmatprep.subr.bf16.mxu0 0
        %977 = vmatpush1.bf16.xpose.msra.mxu0 0
        %978 = vmatprep.subr.bf16.mxu0 0
        %979 = vmatpush1.bf16.xpose.msra.mxu0 0
        %980 = vmatprep.subr.bf16.mxu0 0
        %981 = vmatpush1.bf16.xpose.msra.mxu0 0
        %982 = vmatprep.subr.bf16.mxu0 0
        %983 = vmatpush1.bf16.xpose.msra.mxu0 0
        %984 = vmatprep.subr.bf16.mxu0 0
        %985 = vmatpush1.bf16.xpose.msra.mxu0 0
        %986 = vmatprep.subr.bf16.mxu0 0
        %987 = vmatpush1.bf16.xpose.msra.mxu0 0
        %988 = vmatprep.subr.bf16.mxu0 0
        %989 = vmatpush1.bf16.xpose.msra.mxu0 0
        %990 = vmatprep.subr.bf16.mxu0 0
        %991 = vmatpush1.bf16.xpose.msra.mxu0 0
        %992 = vmatprep.subr.bf16.mxu0 0
        %993 = vmatpush1.bf16.xpose.msra.mxu0 0
        %994 = vmatprep.subr.bf16.mxu0 0
        %995 = vmatpush1.bf16.xpose.msra.mxu0 0
        %996 = vmatprep.mubr.bf16.mxu0 0
        %997 = vmatmul.mubr.bf16.gmra.mrb[0].mxu0 %v959
        %v998 = vpop.f32.mrb[0].mxu0
        %v999 = vadd.f32 0.0, %v998
        %v1000 = vpop.f32.mrb[0].mxu0
        %v1001 = vpop.f32.mrb[0].mxu0
        %v1002 = vpop.f32.mrb[0].mxu0
        %1003 = vdwg.mxu0
        %v1004 = vsel %vm819, %v861, -inf
        %1005 = vmax.xlane.f32.xlu0 %v1004
        %v1006 = vpop.xlane.xlu0 %1005
        %v1007 = vsel %vm819, %v907, -inf
        %1008 = vmax.xlane.f32.xlu0 %v1007
        %v1009 = vpop.xlane.xlu0 %1008
        %v1010 = vsel %vm819, %v953, -inf
        %1011 = vmax.xlane.f32.xlu0 %v1010
        %v1012 = vpop.xlane.xlu0 %1011
        %v1013 = vsel %vm819, %v999, -inf
        %1014 = vmax.xlane.f32.xlu0 %v1013
        %v1015 = vpop.xlane.xlu0 %1014
        %v1016 = vsub.f32 %v861, %v1006
        %v1017 = vsub.f32 %v907, %v1009
        %v1018 = vsub.f32 %v953, %v1012
        %v1019 = vsub.f32 %v999, %v1015
        %v1020 = vmul.f32 %v1016, 1.442695
        %v1021 = vpow.pop %v1020
        %v1022 = vmul.f32 %v1017, 1.442695
        %v1023 = vpow.pop %v1022
        %v1024 = vmul.f32 %v1018, 1.442695
        %v1025 = vpow.pop %v1024
        %v1026 = vmul.f32 %v1019, 1.442695
        %v1027 = vpow.pop %v1026
        %v1028 = vsel %vm819, %v1021, 0.0
        %1029 = vadd.xlane.f32.xlu0 %v1028
        %v1030 = vpop.xlane.xlu0 %1029
        %v1031 = vsel %vm819, %v1023, 0.0
        %1032 = vadd.xlane.f32.xlu0 %v1031
        %v1033 = vpop.xlane.xlu0 %1032
        %v1034 = vsel %vm819, %v1025, 0.0
        %1035 = vadd.xlane.f32.xlu0 %v1034
        %v1036 = vpop.xlane.xlu0 %1035
        %v1037 = vsel %vm819, %v1027, 0.0
        %1038 = vadd.xlane.f32.xlu0 %v1037
        %v1039 = vpop.xlane.xlu0 %1038
        %v1040 = vrcp.pop %v1030
        %v1041 = vrcp.pop %v1033
        %v1042 = vrcp.pop %v1036
        %v1043 = vrcp.pop %v1039
        %v1044 = vmul.f32 %v1021, %v1040
        %v1045 = vmul.f32 %v1023, %v1041
        %v1046 = vmul.f32 %v1025, %v1042
        %v1047 = vmul.f32 %v1027, %v1043
        %v1048 = vpack.c.bf16 %v1044, %v1044
        %v1049 = vpack.c.bf16 %v1045, %v1045
        %v1050 = vpack.c.bf16 %v1046, %v1046
        %v1051 = vpack.c.bf16 %v1047, %v1047
        %v1053 = vsel %vm819, %v1048, 0
        %vm1055 = vcmask 1043456
        %v1057 = vsel %vm1055, %v815, 0
        %1059 = vmatprep.subr.bf16.mxu0 0
        %1060 = vmatpush1.bf16.msra.mxu0 %v1057
        %1061 = vmatprep.subr.bf16.mxu0 0
        %1062 = vmatpush1.bf16.msra.mxu0 0
        %1063 = vmatprep.subr.bf16.mxu0 0
        %1064 = vmatpush1.bf16.msra.mxu0 0
        %1065 = vmatprep.subr.bf16.mxu0 0
        %1066 = vmatpush1.bf16.msra.mxu0 0
        %1067 = vmatprep.subr.bf16.mxu0 0
        %1068 = vmatpush1.bf16.msra.mxu0 0
        %1069 = vmatprep.subr.bf16.mxu0 0
        %1070 = vmatpush1.bf16.msra.mxu0 0
        %1071 = vmatprep.subr.bf16.mxu0 0
        %1072 = vmatpush1.bf16.msra.mxu0 0
        %1073 = vmatprep.subr.bf16.mxu0 0
        %1074 = vmatpush1.bf16.msra.mxu0 0
        %1075 = vmatprep.subr.bf16.mxu0 0
        %1076 = vmatpush1.bf16.msra.mxu0 0
        %1077 = vmatprep.subr.bf16.mxu0 0
        %1078 = vmatpush1.bf16.msra.mxu0 0
        %1079 = vmatprep.subr.bf16.mxu0 0
        %1080 = vmatpush1.bf16.msra.mxu0 0
        %1081 = vmatprep.subr.bf16.mxu0 0
        %1082 = vmatpush1.bf16.msra.mxu0 0
        %1083 = vmatprep.subr.bf16.mxu0 0
        %1084 = vmatpush1.bf16.msra.mxu0 0
        %1085 = vmatprep.subr.bf16.mxu0 0
        %1086 = vmatpush1.bf16.msra.mxu0 0
        %1087 = vmatprep.subr.bf16.mxu0 0
        %1088 = vmatpush1.bf16.msra.mxu0 0
        %1089 = vmatprep.subr.bf16.mxu0 0
        %1090 = vmatpush1.bf16.msra.mxu0 0
        %1091 = vmatprep.mubr.bf16.mxu0 0
        %1092 = vmatmul.mubr.bf16.gmra.mrb[0].mxu0 %v1053
        %v1093 = vpop.f32.mrb[0].mxu0
        %v1094 = vadd.f32 0.0, %v1093
        %v1095 = vpop.f32.mrb[0].mxu0
        %v1096 = vpop.f32.mrb[0].mxu0
        %v1097 = vpop.f32.mrb[0].mxu0
        %1098 = vdwg.mxu0
        %v1100 = vsel %vm819, %v1049, 0
        %v1103 = vsel %vm1055, %v816, 0
        %1105 = vmatprep.subr.bf16.mxu0 0
        %1106 = vmatpush1.bf16.msra.mxu0 %v1103
        %1107 = vmatprep.subr.bf16.mxu0 0
        %1108 = vmatpush1.bf16.msra.mxu0 0
        %1109 = vmatprep.subr.bf16.mxu0 0
        %1110 = vmatpush1.bf16.msra.mxu0 0
        %1111 = vmatprep.subr.bf16.mxu0 0
        %1112 = vmatpush1.bf16.msra.mxu0 0
        %1113 = vmatprep.subr.bf16.mxu0 0
        %1114 = vmatpush1.bf16.msra.mxu0 0
        %1115 = vmatprep.subr.bf16.mxu0 0
        %1116 = vmatpush1.bf16.msra.mxu0 0
        %1117 = vmatprep.subr.bf16.mxu0 0
        %1118 = vmatpush1.bf16.msra.mxu0 0
        %1119 = vmatprep.subr.bf16.mxu0 0
        %1120 = vmatpush1.bf16.msra.mxu0 0
        %1121 = vmatprep.subr.bf16.mxu0 0
        %1122 = vmatpush1.bf16.msra.mxu0 0
        %1123 = vmatprep.subr.bf16.mxu0 0
        %1124 = vmatpush1.bf16.msra.mxu0 0
        %1125 = vmatprep.subr.bf16.mxu0 0
        %1126 = vmatpush1.bf16.msra.mxu0 0
        %1127 = vmatprep.subr.bf16.mxu0 0
        %1128 = vmatpush1.bf16.msra.mxu0 0
        %1129 = vmatprep.subr.bf16.mxu0 0
        %1130 = vmatpush1.bf16.msra.mxu0 0
        %1131 = vmatprep.subr.bf16.mxu0 0
        %1132 = vmatpush1.bf16.msra.mxu0 0
        %1133 = vmatprep.subr.bf16.mxu0 0
        %1134 = vmatpush1.bf16.msra.mxu0 0
        %1135 = vmatprep.subr.bf16.mxu0 0
        %1136 = vmatpush1.bf16.msra.mxu0 0
        %1137 = vmatprep.mubr.bf16.mxu0 0
        %1138 = vmatmul.mubr.bf16.gmra.mrb[0].mxu0 %v1100
        %v1139 = vpop.f32.mrb[0].mxu0
        %v1140 = vadd.f32 0.0, %v1139
        %v1141 = vpop.f32.mrb[0].mxu0
        %v1142 = vpop.f32.mrb[0].mxu0
        %v1143 = vpop.f32.mrb[0].mxu0
        %1144 = vdwg.mxu0
        %v1146 = vsel %vm819, %v1050, 0
        %v1149 = vsel %vm1055, %v817, 0
        %1151 = vmatprep.subr.bf16.mxu0 0
        %1152 = vmatpush1.bf16.msra.mxu0 %v1149
        %1153 = vmatprep.subr.bf16.mxu0 0
        %1154 = vmatpush1.bf16.msra.mxu0 0
        %1155 = vmatprep.subr.bf16.mxu0 0
        %1156 = vmatpush1.bf16.msra.mxu0 0
        %1157 = vmatprep.subr.bf16.mxu0 0
        %1158 = vmatpush1.bf16.msra.mxu0 0
        %1159 = vmatprep.subr.bf16.mxu0 0
        %1160 = vmatpush1.bf16.msra.mxu0 0
        %1161 = vmatprep.subr.bf16.mxu0 0
        %1162 = vmatpush1.bf16.msra.mxu0 0
        %1163 = vmatprep.subr.bf16.mxu0 0
        %1164 = vmatpush1.bf16.msra.mxu0 0
        %1165 = vmatprep.subr.bf16.mxu0 0
        %1166 = vmatpush1.bf16.msra.mxu0 0
        %1167 = vmatprep.subr.bf16.mxu0 0
        %1168 = vmatpush1.bf16.msra.mxu0 0
        %1169 = vmatprep.subr.bf16.mxu0 0
        %1170 = vmatpush1.bf16.msra.mxu0 0
        %1171 = vmatprep.subr.bf16.mxu0 0
        %1172 = vmatpush1.bf16.msra.mxu0 0
        %1173 = vmatprep.subr.bf16.mxu0 0
        %1174 = vmatpush1.bf16.msra.mxu0 0
        %1175 = vmatprep.subr.bf16.mxu0 0
        %1176 = vmatpush1.bf16.msra.mxu0 0
        %1177 = vmatprep.subr.bf16.mxu0 0
        %1178 = vmatpush1.bf16.msra.mxu0 0
        %1179 = vmatprep.subr.bf16.mxu0 0
        %1180 = vmatpush1.bf16.msra.mxu0 0
        %1181 = vmatprep.subr.bf16.mxu0 0
        %1182 = vmatpush1.bf16.msra.mxu0 0
        %1183 = vmatprep.mubr.bf16.mxu0 0
        %1184 = vmatmul.mubr.bf16.gmra.mrb[0].mxu0 %v1146
        %v1185 = vpop.f32.mrb[0].mxu0
        %v1186 = vadd.f32 0.0, %v1185
        %v1187 = vpop.f32.mrb[0].mxu0
        %v1188 = vpop.f32.mrb[0].mxu0
        %v1189 = vpop.f32.mrb[0].mxu0
        %1190 = vdwg.mxu0
        %v1192 = vsel %vm819, %v1051, 0
        %v1195 = vsel %vm1055, %v818, 0
        %1197 = vmatprep.subr.bf16.mxu0 0
        %1198 = vmatpush1.bf16.msra.mxu0 %v1195
        %1199 = vmatprep.subr.bf16.mxu0 0
        %1200 = vmatpush1.bf16.msra.mxu0 0
        %1201 = vmatprep.subr.bf16.mxu0 0
        %1202 = vmatpush1.bf16.msra.mxu0 0
        %1203 = vmatprep.subr.bf16.mxu0 0
        %1204 = vmatpush1.bf16.msra.mxu0 0
        %1205 = vmatprep.subr.bf16.mxu0 0
        %1206 = vmatpush1.bf16.msra.mxu0 0
        %1207 = vmatprep.subr.bf16.mxu0 0
        %1208 = vmatpush1.bf16.msra.mxu0 0
        %1209 = vmatprep.subr.bf16.mxu0 0
        %1210 = vmatpush1.bf16.msra.mxu0 0
        %1211 = vmatprep.subr.bf16.mxu0 0
        %1212 = vmatpush1.bf16.msra.mxu0 0
        %1213 = vmatprep.subr.bf16.mxu0 0
        %1214 = vmatpush1.bf16.msra.mxu0 0
        %1215 = vmatprep.subr.bf16.mxu0 0
        %1216 = vmatpush1.bf16.msra.mxu0 0
        %1217 = vmatprep.subr.bf16.mxu0 0
        %1218 = vmatpush1.bf16.msra.mxu0 0
        %1219 = vmatprep.subr.bf16.mxu0 0
        %1220 = vmatpush1.bf16.msra.mxu0 0
        %1221 = vmatprep.subr.bf16.mxu0 0
        %1222 = vmatpush1.bf16.msra.mxu0 0
        %1223 = vmatprep.subr.bf16.mxu0 0
        %1224 = vmatpush1.bf16.msra.mxu0 0
        %1225 = vmatprep.subr.bf16.mxu0 0
        %1226 = vmatpush1.bf16.msra.mxu0 0
        %1227 = vmatprep.subr.bf16.mxu0 0
        %1228 = vmatpush1.bf16.msra.mxu0 0
        %1229 = vmatprep.mubr.bf16.mxu0 0
        %1230 = vmatmul.mubr.bf16.gmra.mrb[0].mxu0 %v1192
        %v1231 = vpop.f32.mrb[0].mxu0
        %v1232 = vadd.f32 0.0, %v1231
        %v1233 = vpop.f32.mrb[0].mxu0
        %v1234 = vpop.f32.mrb[0].mxu0
        %v1235 = vpop.f32.mrb[0].mxu0
        %1236 = vdwg.mxu0
        %1238 = vrot.lane.b32.xlu0 %v1140, 8
        %v1239 = vpop.permute.xlu0 %1238
        %1242 = vrot.lane.b32.xlu0 %v1186, 16
        %v1243 = vpop.permute.xlu0 %1242
        %1246 = vrot.lane.b32.xlu0 %v1232, 24
        %v1247 = vpop.permute.xlu0 %1246
        %v1249 = vsel %vm819, %v1094, %v1239
        %vm1250 = vcmask 130048
        %v1251 = vsel %vm1250, %v1249, %v1243
        %vm1252 = vcmask 195584
        %v1253 = vsel %vm1252, %v1251, %v1247
        %v1254 = vpack.c.bf16 %v1253, %v1253
        %v1255 = vld [vmem:[%s8] sm:$0xf]
        %v1256 = vld [vmem:[%s8 + $0x4] sm:$0xf]
        %v1257 = vld [vmem:[%s8 + $0x8] sm:$0xf]
        %v1258 = vld [vmem:[%s8 + $0xc] sm:$0xf]
        %v1259 = vld [vmem:[%s9] sm:$0x1]
        %v1261 = vlaneseq
        %v1262 = vshrl.u32 %v1261, 7
        %v1263 = vsub.s32 0, %v1262
        %v1264 = vrot.slane %v1259, %v1263
        %v1270 = vunpack.c.l.b16 %v1255
        %v1271 = vunpack.c.l.b16 %v1256
        %v1272 = vunpack.c.l.b16 %v1257
        %v1273 = vunpack.c.l.b16 %v1258
        %v1274 = vpack.c.b16 %v1271, %v1270
        %v1275 = vpack.c.b16 %v1273, %v1272
        %v1279 = vsel %vm706, %v1254, 0
        %1281 = vmatprep.subr.bf16.mxu0 0
        %1282 = vmatpush1.bf16.msra.mxu0 %v1274
        %1283 = vmatprep.subr.bf16.mxu0 0
        %1284 = vmatpush1.bf16.msra.mxu0 %v1275
        %1285 = vmatprep.subr.bf16.mxu0 0
        %1286 = vmatpush1.bf16.msra.mxu0 0
        %1287 = vmatprep.subr.bf16.mxu0 0
        %1288 = vmatpush1.bf16.msra.mxu0 0
        %1289 = vmatprep.subr.bf16.mxu0 0
        %1290 = vmatpush1.bf16.msra.mxu0 0
        %1291 = vmatprep.subr.bf16.mxu0 0
        %1292 = vmatpush1.bf16.msra.mxu0 0
        %1293 = vmatprep.subr.bf16.mxu0 0
        %1294 = vmatpush1.bf16.msra.mxu0 0
        %1295 = vmatprep.subr.bf16.mxu0 0
        %1296 = vmatpush1.bf16.msra.mxu0 0
        %1297 = vmatprep.subr.bf16.mxu0 0
        %1298 = vmatpush1.bf16.msra.mxu0 0
        %1299 = vmatprep.subr.bf16.mxu0 0
        %1300 = vmatpush1.bf16.msra.mxu0 0
        %1301 = vmatprep.subr.bf16.mxu0 0
        %1302 = vmatpush1.bf16.msra.mxu0 0
        %1303 = vmatprep.subr.bf16.mxu0 0
        %1304 = vmatpush1.bf16.msra.mxu0 0
        %1305 = vmatprep.subr.bf16.mxu0 0
        %1306 = vmatpush1.bf16.msra.mxu0 0
        %1307 = vmatprep.subr.bf16.mxu0 0
        %1308 = vmatpush1.bf16.msra.mxu0 0
        %1309 = vmatprep.subr.bf16.mxu0 0
        %1310 = vmatpush1.bf16.msra.mxu0 0
        %1311 = vmatprep.subr.bf16.mxu0 0
        %1312 = vmatpush1.bf16.msra.mxu0 0
        %1313 = vmatprep.mubr.bf16.mxu0 0
        %1314 = vmatmul.mubr.bf16.gmra.mrb[0].mxu0 %v1279
        %v1315 = vpop.f32.mrb[0].mxu0
        %v1316 = vadd.f32 %v1264, %v1315
        %v1317 = vpop.f32.mrb[0].mxu0
        %v1318 = vpop.f32.mrb[0].mxu0
        %v1319 = vpop.f32.mrb[0].mxu0
        %1320 = vdwg.mxu0
        %v1321 = vadd.f32 %v734, %v1316
        %v1322 = vld [vmem:[%s10] sm:$0x1]
        %v1323 = vld [vmem:[%s11] sm:$0x1]
        %v1324 = vsel %vm706, %v1321, 0.0
        %1325 = vadd.xlane.f32.xlu0 %v1324
        %v1326 = vpop.xlane.xlu0 %1325
        %v1327 = vmul.f32 %v1326, %v710
        %v1328 = vsub.f32 %v1321, %v1327
        %v1329 = vmul.f32 %v1328, %v1328
        %v1330 = vsel %vm706, %v1329, 0.0
        %1331 = vadd.xlane.f32.xlu0 %v1330
        %v1332 = vpop.xlane.xlu0 %1331
        %v1333 = vmul.f32 %v1332, %v710
        %v1334 = vadd.f32 %v1333, 1e-05
        %v1335 = vrsqrt.pop %v1334
        %v1336 = vmul.f32 %v1328, %v1335
        %v1338 = vlaneseq
        %v1339 = vshrl.u32 %v1338, 7
        %v1340 = vsub.s32 0, %v1339
        %v1341 = vrot.slane %v1322, %v1340
        %v1343 = vmul.f32 %v1336, %v1341
        %v1345 = vlaneseq
        %v1346 = vshrl.u32 %v1345, 7
        %v1347 = vsub.s32 0, %v1346
        %v1348 = vrot.slane %v1323, %v1347
        %v1350 = vadd.f32 %v1343, %v1348
        %v1351 = vpack.c.bf16 %v1350, %v1350
        %v1352 = vld [vmem:[%s12] sm:$0xf]
        %v1353 = vld [vmem:[%s12 + $0x4] sm:$0xf]
        %v1354 = vld [vmem:[%s12 + $0x8] sm:$0xf]
        %v1355 = vld [vmem:[%s12 + $0xc] sm:$0xf]
        %v1356 = vld [vmem:[%s13] sm:$0x1]
        %v1358 = vlaneseq
        %v1359 = vshrl.u32 %v1358, 7
        %v1360 = vsub.s32 0, %v1359
        %v1361 = vrot.slane %v1356, %v1360
        %v1367 = vunpack.c.l.b16 %v1352
        %v1368 = vunpack.c.l.b16 %v1353
        %v1369 = vunpack.c.l.b16 %v1354
        %v1370 = vunpack.c.l.b16 %v1355
        %v1371 = vpack.c.b16 %v1368, %v1367
        %v1372 = vpack.c.b16 %v1370, %v1369
        %v1376 = vsel %vm706, %v1351, 0
        %1378 = vmatprep.subr.bf16.mxu0 0
        %1379 = vmatpush1.bf16.msra.mxu0 %v1371
        %1380 = vmatprep.subr.bf16.mxu0 0
        %1381 = vmatpush1.bf16.msra.mxu0 %v1372
        %1382 = vmatprep.subr.bf16.mxu0 0
        %1383 = vmatpush1.bf16.msra.mxu0 0
        %1384 = vmatprep.subr.bf16.mxu0 0
        %1385 = vmatpush1.bf16.msra.mxu0 0
        %1386 = vmatprep.subr.bf16.mxu0 0
        %1387 = vmatpush1.bf16.msra.mxu0 0
        %1388 = vmatprep.subr.bf16.mxu0 0
        %1389 = vmatpush1.bf16.msra.mxu0 0
        %1390 = vmatprep.subr.bf16.mxu0 0
        %1391 = vmatpush1.bf16.msra.mxu0 0
        %1392 = vmatprep.subr.bf16.mxu0 0
        %1393 = vmatpush1.bf16.msra.mxu0 0
        %1394 = vmatprep.subr.bf16.mxu0 0
        %1395 = vmatpush1.bf16.msra.mxu0 0
        %1396 = vmatprep.subr.bf16.mxu0 0
        %1397 = vmatpush1.bf16.msra.mxu0 0
        %1398 = vmatprep.subr.bf16.mxu0 0
        %1399 = vmatpush1.bf16.msra.mxu0 0
        %1400 = vmatprep.subr.bf16.mxu0 0
        %1401 = vmatpush1.bf16.msra.mxu0 0
        %1402 = vmatprep.subr.bf16.mxu0 0
        %1403 = vmatpush1.bf16.msra.mxu0 0
        %1404 = vmatprep.subr.bf16.mxu0 0
        %1405 = vmatpush1.bf16.msra.mxu0 0
        %1406 = vmatprep.subr.bf16.mxu0 0
        %1407 = vmatpush1.bf16.msra.mxu0 0
        %1408 = vmatprep.subr.bf16.mxu0 0
        %1409 = vmatpush1.bf16.msra.mxu0 0
        %1410 = vmatprep.mubr.bf16.mxu0 0
        %1411 = vmatmul.mubr.bf16.gmra.mrb[0].mxu0 %v1376
        %v1412 = vpop.f32.mrb[0].mxu0
        %v1413 = vadd.f32 %v1361, %v1412
        %v1414 = vpop.f32.mrb[0].mxu0
        %v1415 = vpop.f32.mrb[0].mxu0
        %v1416 = vpop.f32.mrb[0].mxu0
        %1417 = vdwg.mxu0
        %v1418 = vmax.f32 %v1413, 0.0
        %v1419 = vpack.c.bf16 %v1418, %v1418
        %v1420 = vld [vmem:[%s14] sm:$0xf]
        %v1421 = vld [vmem:[%s14 + $0x4] sm:$0xf]
        %v1422 = vld [vmem:[%s14 + $0x8] sm:$0xf]
        %v1423 = vld [vmem:[%s14 + $0xc] sm:$0xf]
        %v1424 = vld [vmem:[%s14 + $0x10] sm:$0xf]
        %v1425 = vld [vmem:[%s14 + $0x14] sm:$0xf]
        %v1426 = vld [vmem:[%s14 + $0x18] sm:$0xf]
        %v1427 = vld [vmem:[%s14 + $0x1c] sm:$0xf]
        %v1428 = vld [vmem:[%s14 + $0x20] sm:$0xf]
        %v1429 = vld [vmem:[%s14 + $0x24] sm:$0xf]
        %v1430 = vld [vmem:[%s14 + $0x28] sm:$0xf]
        %v1431 = vld [vmem:[%s14 + $0x2c] sm:$0xf]
        %v1432 = vld [vmem:[%s14 + $0x30] sm:$0xf]
        %v1433 = vld [vmem:[%s14 + $0x34] sm:$0xf]
        %v1434 = vld [vmem:[%s14 + $0x38] sm:$0xf]
        %v1435 = vld [vmem:[%s14 + $0x3c] sm:$0xf]
        %v1436 = vld [vmem:[%s15] sm:$0x1]
        %v1438 = vlaneseq
        %v1439 = vshrl.u32 %v1438, 7
        %v1440 = vsub.s32 0, %v1439
        %v1441 = vrot.slane %v1436, %v1440
        %v1459 = vunpack.c.l.b16 %v1420
        %v1460 = vunpack.c.l.b16 %v1421
        %v1461 = vunpack.c.l.b16 %v1422
        %v1462 = vunpack.c.l.b16 %v1423
        %v1463 = vunpack.c.l.b16 %v1424
        %v1464 = vunpack.c.l.b16 %v1425
        %v1465 = vunpack.c.l.b16 %v1426
        %v1466 = vunpack.c.l.b16 %v1427
        %v1467 = vunpack.c.l.b16 %v1428
        %v1468 = vunpack.c.l.b16 %v1429
        %v1469 = vunpack.c.l.b16 %v1430
        %v1470 = vunpack.c.l.b16 %v1431
        %v1471 = vunpack.c.l.b16 %v1432
        %v1472 = vunpack.c.l.b16 %v1433
        %v1473 = vunpack.c.l.b16 %v1434
        %v1474 = vunpack.c.l.b16 %v1435
        %v1475 = vpack.c.b16 %v1460, %v1459
        %v1476 = vpack.c.b16 %v1462, %v1461
        %v1477 = vpack.c.b16 %v1464, %v1463
        %v1478 = vpack.c.b16 %v1466, %v1465
        %v1479 = vpack.c.b16 %v1468, %v1467
        %v1480 = vpack.c.b16 %v1470, %v1469
        %v1481 = vpack.c.b16 %v1472, %v1471
        %v1482 = vpack.c.b16 %v1474, %v1473
        %1491 = vmatprep.subr.bf16.mxu0 0
        %1492 = vmatpush1.bf16.msra.mxu0 %v1475
        %1493 = vmatprep.subr.bf16.mxu0 0
        %1494 = vmatpush1.bf16.msra.mxu0 %v1476
        %1495 = vmatprep.subr.bf16.mxu0 0
        %1496 = vmatpush1.bf16.msra.mxu0 %v1477
        %1497 = vmatprep.subr.bf16.mxu0 0
        %1498 = vmatpush1.bf16.msra.mxu0 %v1478
        %1499 = vmatprep.subr.bf16.mxu0 0
        %1500 = vmatpush1.bf16.msra.mxu0 %v1479
        %1501 = vmatprep.subr.bf16.mxu0 0
        %1502 = vmatpush1.bf16.msra.mxu0 %v1480
        %1503 = vmatprep.subr.bf16.mxu0 0
        %1504 = vmatpush1.bf16.msra.mxu0 %v1481
        %1505 = vmatprep.subr.bf16.mxu0 0
        %1506 = vmatpush1.bf16.msra.mxu0 %v1482
        %1507 = vmatprep.subr.bf16.mxu0 0
        %1508 = vmatpush1.bf16.msra.mxu0 0
        %1509 = vmatprep.subr.bf16.mxu0 0
        %1510 = vmatpush1.bf16.msra.mxu0 0
        %1511 = vmatprep.subr.bf16.mxu0 0
        %1512 = vmatpush1.bf16.msra.mxu0 0
        %1513 = vmatprep.subr.bf16.mxu0 0
        %1514 = vmatpush1.bf16.msra.mxu0 0
        %1515 = vmatprep.subr.bf16.mxu0 0
        %1516 = vmatpush1.bf16.msra.mxu0 0
        %1517 = vmatprep.subr.bf16.mxu0 0
        %1518 = vmatpush1.bf16.msra.mxu0 0
        %1519 = vmatprep.subr.bf16.mxu0 0
        %1520 = vmatpush1.bf16.msra.mxu0 0
        %1521 = vmatprep.subr.bf16.mxu0 0
        %1522 = vmatpush1.bf16.msra.mxu0 0
        %1523 = vmatprep.mubr.bf16.mxu0 0
        %1524 = vmatmul.mubr.bf16.gmra.mrb[0].mxu0 %v1419
        %v1525 = vpop.f32.mrb[0].mxu0
        %v1526 = vadd.f32 %v1441, %v1525
        %v1527 = vpop.f32.mrb[0].mxu0
        %v1528 = vpop.f32.mrb[0].mxu0
        %v1529 = vpop.f32.mrb[0].mxu0
        %1530 = vdwg.mxu0
        %v1531 = vadd.f32 %v1350, %v1526
        %1532 = vst.msk [vmem:[%s547] sm:$0xff] %vm706, %v1531
        %s1533 = sand.u32 %s400, 1
        %s1534 = scalar_lea.sflag [#allocation5], %s1533
        %s1535 = sand.u32 %s400, 1
        %s1536 = smul.addr %s1535, 8
        %s1537 = scalar_lea.vmem [#allocation4], %s1536
        // Predicated region
        $region89: #{tpu_custom_call.1} parent=83 // pred_check
          %p1538 = pneg %p410
        $region90: #{tpu_custom_call.1} parent=83 // pred_check_branch
          %1540 = sbr.rel (%p1538) target = $region92
        $region91: #{tpu_custom_call.1} parent=83 // pred_region
          %s1542 = ssub.s32 128, 128
          %1543 = vsyncadd %s1534, %s1542
          %s1544 = sadd.s32 %s35, %s34
          %s1545 = smul.addr %s1544, 128
          %s1546 = scalar_lea.hbm %s16, %s1545
          %s1548 = sshll.u32 %s1537, 4
          %s1549 = int_to_ptr.vmem [resolvable:$true] %s1548
          %1551 = dma.vmem_to_hbm [thread:$0]  %s1549, 128, %s1546, %s1534
        $region92: #{tpu_custom_call.1} parent=83 // pred_fallthru
          _
      $region84: #{tpu_custom_call.1} parent=5 // pred_fallthru
        _
      %p1552 = scmp.le.s32.totalorder 2, %s25
      // Predicated region
      $region93: #{tpu_custom_call.1} parent=5 // pred_check
        %p1553 = pneg %p1552
      $region94: #{tpu_custom_call.1} parent=5 // pred_check_branch
        %1555 = sbr.rel (%p1553) target = $region96
      $region95: #{tpu_custom_call.1} parent=5 // pred_region
        %s1556 = ssub.s32 %s25, 2
        // Predicated region
        $region97: #{tpu_custom_call.1} parent=95 // pred_check
          %p1557 = pneg %p416
        $region98: #{tpu_custom_call.1} parent=95 // pred_check_branch
          %1559 = sbr.rel (%p1557) target = $region100
        $region99: #{tpu_custom_call.1} parent=95 // pred_region
          %s1560 = sand.u32 %s401, 1
          %s1561 = scalar_lea.sflag [#allocation5], %s1560
          %s1562 = sand.u32 %s401, 1
          %s1563 = smul.addr %s1562, 8
          %s1564 = scalar_lea.vmem [#allocation4], %s1563
          %1565 = dma.done %s1561, 128
        $region100: #{tpu_custom_call.1} parent=95 // pred_fallthru
          _
      $region96: #{tpu_custom_call.1} parent=5 // pred_fallthru
        _
    $region6: #{tpu_custom_call.1} parent=1 // loop_footer
      %s29 = sadd.s32 1, %s25
    $region7: #{tpu_custom_call.1} parent=1 // loop_footer_branch
      %24 = sbr.rel target = $region3
    $region8: #{tpu_custom_call.1} parent=1 // loop_exit
      _
    %1566 = vsyncpa [#allocation5], 1
    %s1567 = scalar_lea.sflag [#allocation5], 1
    %1568 = vsyncpa %s1567, 1

</llo_original>
